<compile_context>
chip_gen: v7x
topology: tpu7x:2x2x1
jax: 0.10.0
libtpu: 0.0.40
codegen_flags: <defaults>
</compile_context>

<pallas_src>
import jax
import jax.numpy as jnp
from jax.experimental import pallas as pl
from jax.experimental.pallas import tpu as pltpu


# Fixed channel plan of the PyTorch module: 64 -> 32 -> 16 -> 3.
_C0, _C1, _C2, _C3 = 64, 32, 16, 3
_C3P = 4                            # layer-3 out channels padded 3 -> 4
_LANES_OUT = 16 * 4 * _C3P          # 16 (t1,t2) taps * 4 t3 taps * 4 ch = 256 lanes


def _round_up(x, m):
    return (x + m - 1) // m * m


def _fused_decoder_kernel(x_ref, w1_ref, b1_ref, w2_ref, b2_ref, w3_ref, b3_ref,
                          o_ref):
    """All three deconv(k=2,s=2)+ReLU layers for one tile of layer-1 pixels.

    x_ref : (TM, 64)  bf16, flattened-NHWC layer-1 pixels
    w1    : (64, 128) bf16  tap-major           (lane = 32*t1 + c1)
    w2    : (128,256) bf16  block-diag tap-major (lane = 64*t1 + 16*t2 + c2)
    w3    : (256,256) bf16  block-diag tap-major (lane = 16*(4*t1+t2) + 4*t3 + c)
    b*    : (1, N) f32 row vectors matching each layer's lane order
    o_ref : (TM, 256) bf16, lane = 128*t1h + 64*t1w + 32*t2h + 16*t2w
                                  + 8*t3h + 4*t3w + c_padded
    """
    # Layer 1: (TM,64)@(64,128) on the MXU, f32 accumulate, bias+ReLU on VPU.
    h1 = jnp.dot(x_ref[...], w1_ref[...],
                 preferred_element_type=jnp.float32) + b1_ref[...]
    h1 = jnp.maximum(h1, 0.0).astype(jnp.bfloat16)            # (TM, 128)

    # Layer 2: one block-diagonal (TM,128)@(128,256) instead of 4 K=32 matmuls.
    h2 = jnp.dot(h1, w2_ref[...],
                 preferred_element_type=jnp.float32) + b2_ref[...]
    h2 = jnp.maximum(h2, 0.0).astype(jnp.bfloat16)            # (TM, 256)

    # Layer 3: one block-diagonal (TM,256)@(256,256) instead of 16 K=16 matmuls.
    y = jnp.dot(h2, w3_ref[...],
                preferred_element_type=jnp.float32) + b3_ref[...]
    # Single dense, 256-lane (vreg-aligned) store; bf16 halves HBM writeback.
    o_ref[...] = jnp.maximum(y, 0.0).astype(o_ref.dtype)


def _tap_major_weight(w, pad_to=None):
    """(Ci, Co, 2, 2) -> (Ci, 4*Co_p) with lane = (2*kh + kw)*Co_p + oc."""
    ci, co = w.shape[0], w.shape[1]
    wt = jnp.transpose(w, (0, 2, 3, 1))                       # (Ci, 2, 2, Co)
    if pad_to is not None and pad_to > co:
        wt = jnp.pad(wt, ((0, 0), (0, 0), (0, 0), (0, pad_to - co)))
        co = pad_to
    return wt.reshape(ci, 4 * co)


def _block_diag(block, n):
    """n copies of `block` on the diagonal: (ci, co) -> (n*ci, n*co)."""
    ci, co = block.shape
    eye = jnp.eye(n, dtype=block.dtype)
    return jnp.einsum("ij,ab->iajb", eye, block).reshape(n * ci, n * co)


def _tiled_bias(b, reps, pad_to=None):
    """(Co,) -> (1, reps*Co_p): bias repeated per tap/block to match lane order."""
    if pad_to is not None and pad_to > b.shape[0]:
        b = jnp.pad(b, (0, pad_to - b.shape[0]))
    return jnp.tile(b, reps).reshape(1, -1)


def conv_decoder(x_nchw, params, *, tile_m=512):
    """Forward pass of the PyTorch ConvDecoder. x: (N, 64, H, W) -> (N, 3, 8H, 8W)."""
    (w1, b1), (w2, b2), (w3, b3) = params
    Nb, Ci, H, W = x_nchw.shape
    assert Ci == _C0 and w1.shape[:2] == (_C0, _C1)
    assert w2.shape[:2] == (_C1, _C2) and w3.shape[:2] == (_C2, _C3)

    M = Nb * H * W
    tile_m = min(tile_m, _round_up(M, 8))     # multiple of 8 sublanes
    Mp = _round_up(M, tile_m)

    # Module-boundary layout change: NCHW -> flat (M, C), pixel-major.
    x2d = jnp.transpose(x_nchw, (0, 2, 3, 1)).reshape(M, Ci)
    if Mp != M:
        x2d = jnp.pad(x2d, ((0, Mp - M), (0, 0)))
    x2d = x2d.astype(jnp.bfloat16)            # bf16 MXU operands (f32 accumulation)

    # Weights: tap-major, layers 2/3 block-diagonalized so the whole tile runs
    # as 3 full-width MXU matmuls.  Total weight VMEM: 16 + 64 + 128 KiB bf16.
    w1f = _tap_major_weight(w1).astype(jnp.bfloat16)                        # (64, 128)
    w2f = _block_diag(_tap_major_weight(w2), 4).astype(jnp.bfloat16)        # (128, 256)
    w3f = _block_diag(_tap_major_weight(w3, pad_to=_C3P), 16).astype(jnp.bfloat16)  # (256, 256)
    b1f = _tiled_bias(b1, 4).astype(jnp.float32)                            # (1, 128)
    b2f = _tiled_bias(b2, 16).astype(jnp.float32)                           # (1, 256)
    b3f = _tiled_bias(b3, 64, pad_to=_C3P).astype(jnp.float32)              # (1, 256)

    full = lambda i: (0, 0)                   # weights/biases stay VMEM-resident

    out2d = pl.pallas_call(
        _fused_decoder_kernel,
        out_shape=jax.ShapeDtypeStruct((Mp, _LANES_OUT), jnp.bfloat16),
        grid=(Mp // tile_m,),
        in_specs=[
            pl.BlockSpec((tile_m, _C0), lambda i: (i, 0)),
            pl.BlockSpec(w1f.shape, full),
            pl.BlockSpec(b1f.shape, full),
            pl.BlockSpec(w2f.shape, full),
            pl.BlockSpec(b2f.shape, full),
            pl.BlockSpec(w3f.shape, full),
            pl.BlockSpec(b3f.shape, full),
        ],
        out_specs=pl.BlockSpec((tile_m, _LANES_OUT), lambda i: (i, 0)),
        compiler_params=pltpu.CompilerParams(
            dimension_semantics=("parallel",)),
    )(x2d, w1f, b1f, w2f, b2f, w3f, b3f)

    # Epilogue (bf16, 256 lanes/pixel): lane bits are
    # [t1h, t1w, t2h, t2w, t3h, t3w, c_padded(4)].
    y = out2d[:M].reshape(Nb, H, W, 2, 2, 2, 2, 2, 2, _C3P)[..., :_C3]
    y = jnp.transpose(y, (0, 9, 1, 3, 5, 7, 2, 4, 6, 8))
    return y.reshape(Nb, _C3, 8 * H, 8 * W).astype(x_nchw.dtype)


# ---------------------------------------------------------------------------
# Pure-JAX reference (no Pallas) and test harness.
# ---------------------------------------------------------------------------
def _reference_deconv2x2_relu(x, w, b):
    Nb, Ci, H, W = x.shape
    Co = w.shape[1]
    y = jnp.zeros((Nb, Co, 2 * H, 2 * W), jnp.float32)
    for kh in range(2):
        for kw in range(2):
            tap = jnp.einsum("nchw,co->nohw", x, w[:, :, kh, kw])
            y = y.at[:, :, kh::2, kw::2].set(tap)
    return jnp.maximum(y + b.reshape(1, Co, 1, 1), 0.0)


def _reference_decoder(x, params):
    for w, b in params:
        x = _reference_deconv2x2_relu(x, w, b)
    return x


def make_params(key):
    """Deterministic synthetic parameters matching the module's shapes."""
    shapes = [(_C0, _C1), (_C1, _C2), (_C2, _C3)]
    params = []
    for i, (ci, co) in enumerate(shapes):
        kw_, kb_ = jax.random.split(jax.random.fold_in(key, i))
        w = 0.1 * jax.random.normal(kw_, (ci, co, 2, 2), jnp.float32)
        b = 0.1 * jax.random.normal(kb_, (co,), jnp.float32)
        params.append((w, b))
    return params


if __name__ == "__main__":
    key = jax.random.PRNGKey(0)
    kx, kp = jax.random.split(key)

    # batch=2, C_in=64 (required by deconv1), spatial 16x16 -> M = 512 pixels.
    x = jax.random.normal(kx, (2, 64, 16, 16), jnp.float32)
    params = make_params(kp)

    out = jax.jit(conv_decoder)(x, params)
    out = jax.block_until_ready(out)

    assert out.shape == (2, 3, 128, 128), out.shape

    ref = _reference_decoder(x, params)
    max_err = float(jnp.max(jnp.abs(out.astype(jnp.float32) - ref)))
    # bf16 MXU operands / bf16 inter-layer activations -> loosened tolerance.
    assert jnp.allclose(out.astype(jnp.float32), ref, atol=5e-2, rtol=5e-2), max_err

    print("KERNEL_OK")
</pallas_src>

<mosaic_0001>
module attributes {stable_mosaic.version = 11 : i64} {
  func.func @_fused_decoder_kernel(%arg0: i32, %arg1: memref<512x64xbf16, #tpu.memory_space<vmem>>, %arg2: memref<64x128xbf16, #tpu.memory_space<vmem>>, %arg3: memref<1x128xf32, #tpu.memory_space<vmem>>, %arg4: memref<128x256xbf16, #tpu.memory_space<vmem>>, %arg5: memref<1x256xf32, #tpu.memory_space<vmem>>, %arg6: memref<256x256xbf16, #tpu.memory_space<vmem>>, %arg7: memref<1x256xf32, #tpu.memory_space<vmem>>, %arg8: memref<512x256xbf16, #tpu.memory_space<vmem>>) attributes {dimension_semantics = [#tpu.dimension_semantics<parallel>], iteration_bounds = array<i64: 1>, scalar_prefetch = 0 : i64, scratch_operands = 0 : i64, tpu.core_type = #tpu.core_type<tc>, window_params = [{transform_indices = @transform_0, window_bounds = array<i64: 512, 64>}, {pipeline_mode = #tpu.pipeline_mode<synchronous>, transform_indices = @transform_1, window_bounds = array<i64: 64, 128>}, {pipeline_mode = #tpu.pipeline_mode<synchronous>, transform_indices = @transform_2, window_bounds = array<i64: 1, 128>}, {pipeline_mode = #tpu.pipeline_mode<synchronous>, transform_indices = @transform_3, window_bounds = array<i64: 128, 256>}, {pipeline_mode = #tpu.pipeline_mode<synchronous>, transform_indices = @transform_4, window_bounds = array<i64: 1, 256>}, {pipeline_mode = #tpu.pipeline_mode<synchronous>, transform_indices = @transform_5, window_bounds = array<i64: 256, 256>}, {pipeline_mode = #tpu.pipeline_mode<synchronous>, transform_indices = @transform_6, window_bounds = array<i64: 1, 256>}, {transform_indices = @transform_7, window_bounds = array<i64: 512, 256>}]} {
    %c0 = arith.constant 0 : index
    %c0_0 = arith.constant 0 : index
    %0 = vector.load %arg1[%c0, %c0_0] : memref<512x64xbf16, #tpu.memory_space<vmem>>, vector<512x64xbf16>
    %c0_1 = arith.constant 0 : index
    %c0_2 = arith.constant 0 : index
    %1 = vector.load %arg2[%c0_1, %c0_2] : memref<64x128xbf16, #tpu.memory_space<vmem>>, vector<64x128xbf16>
    %cst = arith.constant dense<0.000000e+00> : vector<512x128xf32>
    %2 = tpu.matmul %0, %1, %cst {dimension_numbers = #tpu.dot_dimension_numbers<[1], [0], [0], [1], [0, 0, 1, 1], [], []>} : vector<512x64xbf16>, vector<64x128xbf16>, vector<512x128xf32> -> vector<512x128xf32>
    %c0_3 = arith.constant 0 : index
    %c0_4 = arith.constant 0 : index
    %3 = vector.load %arg3[%c0_3, %c0_4] : memref<1x128xf32, #tpu.memory_space<vmem>>, vector<1x128xf32>
    %4 = vector.broadcast %3 : vector<1x128xf32> to vector<512x128xf32>
    %5 = arith.addf %2, %4 : vector<512x128xf32>
    %cst_5 = arith.constant 0.000000e+00 : f32
    %6 = vector.broadcast %cst_5 : f32 to vector<512x128xf32>
    %7 = arith.maximumf %5, %6 : vector<512x128xf32>
    %8 = arith.truncf %7 : vector<512x128xf32> to vector<512x128xbf16>
    %c0_6 = arith.constant 0 : index
    %c0_7 = arith.constant 0 : index
    %9 = vector.load %arg4[%c0_6, %c0_7] : memref<128x256xbf16, #tpu.memory_space<vmem>>, vector<128x256xbf16>
    %cst_8 = arith.constant dense<0.000000e+00> : vector<512x256xf32>
    %10 = tpu.matmul %8, %9, %cst_8 {dimension_numbers = #tpu.dot_dimension_numbers<[1], [0], [0], [1], [0, 0, 1, 1], [], []>} : vector<512x128xbf16>, vector<128x256xbf16>, vector<512x256xf32> -> vector<512x256xf32>
    %c0_9 = arith.constant 0 : index
    %c0_10 = arith.constant 0 : index
    %11 = vector.load %arg5[%c0_9, %c0_10] : memref<1x256xf32, #tpu.memory_space<vmem>>, vector<1x256xf32>
    %12 = vector.broadcast %11 : vector<1x256xf32> to vector<512x256xf32>
    %13 = arith.addf %10, %12 : vector<512x256xf32>
    %cst_11 = arith.constant 0.000000e+00 : f32
    %14 = vector.broadcast %cst_11 : f32 to vector<512x256xf32>
    %15 = arith.maximumf %13, %14 : vector<512x256xf32>
    %16 = arith.truncf %15 : vector<512x256xf32> to vector<512x256xbf16>
    %c0_12 = arith.constant 0 : index
    %c0_13 = arith.constant 0 : index
    %17 = vector.load %arg6[%c0_12, %c0_13] : memref<256x256xbf16, #tpu.memory_space<vmem>>, vector<256x256xbf16>
    %cst_14 = arith.constant dense<0.000000e+00> : vector<512x256xf32>
    %18 = tpu.matmul %16, %17, %cst_14 {dimension_numbers = #tpu.dot_dimension_numbers<[1], [0], [0], [1], [0, 0, 1, 1], [], []>} : vector<512x256xbf16>, vector<256x256xbf16>, vector<512x256xf32> -> vector<512x256xf32>
    %c0_15 = arith.constant 0 : index
    %c0_16 = arith.constant 0 : index
    %19 = vector.load %arg7[%c0_15, %c0_16] : memref<1x256xf32, #tpu.memory_space<vmem>>, vector<1x256xf32>
    %20 = vector.broadcast %19 : vector<1x256xf32> to vector<512x256xf32>
    %21 = arith.addf %18, %20 : vector<512x256xf32>
    %cst_17 = arith.constant 0.000000e+00 : f32
    %22 = vector.broadcast %cst_17 : f32 to vector<512x256xf32>
    %23 = arith.maximumf %21, %22 : vector<512x256xf32>
    %24 = arith.truncf %23 : vector<512x256xf32> to vector<512x256xbf16>
    %c0_18 = arith.constant 0 : index
    %c0_19 = arith.constant 0 : index
    %25 = vector.load %arg8[%c0_18, %c0_19] : memref<512x256xbf16, #tpu.memory_space<vmem>>, vector<512x256xbf16>
    tpu.vector_store %arg8[%c0_18, %c0_19], %24 {strides = array<i32>} : memref<512x256xbf16, #tpu.memory_space<vmem>>, vector<512x256xbf16>,
    return
  }
  func.func @transform_0(%arg0: i32) -> (i32, i32) {
    %c0_i32 = arith.constant 0 : i32
    %c0_i32_0 = arith.constant 0 : i32
    return %arg0, %c0_i32 : i32, i32
  }
  func.func @transform_1(%arg0: i32) -> (i32, i32) {
    %c0_i32 = arith.constant 0 : i32
    %c0_i32_0 = arith.constant 0 : i32
    %c0_i32_1 = arith.constant 0 : i32
    return %c0_i32, %c0_i32_0 : i32, i32
  }
  func.func @transform_2(%arg0: i32) -> (i32, i32) {
    %c0_i32 = arith.constant 0 : i32
    %c0_i32_0 = arith.constant 0 : i32
    %c0_i32_1 = arith.constant 0 : i32
    return %c0_i32, %c0_i32_0 : i32, i32
  }
  func.func @transform_3(%arg0: i32) -> (i32, i32) {
    %c0_i32 = arith.constant 0 : i32
    %c0_i32_0 = arith.constant 0 : i32
    %c0_i32_1 = arith.constant 0 : i32
    return %c0_i32, %c0_i32_0 : i32, i32
  }
  func.func @transform_4(%arg0: i32) -> (i32, i32) {
    %c0_i32 = arith.constant 0 : i32
    %c0_i32_0 = arith.constant 0 : i32
    %c0_i32_1 = arith.constant 0 : i32
    return %c0_i32, %c0_i32_0 : i32, i32
  }
  func.func @transform_5(%arg0: i32) -> (i32, i32) {
    %c0_i32 = arith.constant 0 : i32
    %c0_i32_0 = arith.constant 0 : i32
    %c0_i32_1 = arith.constant 0 : i32
    return %c0_i32, %c0_i32_0 : i32, i32
  }
  func.func @transform_6(%arg0: i32) -> (i32, i32) {
    %c0_i32 = arith.constant 0 : i32
    %c0_i32_0 = arith.constant 0 : i32
    %c0_i32_1 = arith.constant 0 : i32
    return %c0_i32, %c0_i32_0 : i32, i32
  }
  func.func @transform_7(%arg0: i32) -> (i32, i32) {
    %c0_i32 = arith.constant 0 : i32
    %c0_i32_0 = arith.constant 0 : i32
    return %arg0, %c0_i32 : i32, i32
  }
}

</mosaic_0001>

<llo_original>
// kernel: tile.18
$region0: #{tile.18}
  #allocation2 [shape = 's32[1]{0}', space=sflag, size = 0x4, scoped, tag = 'scoped memory for tile.18']
  %s0 = inlined_call_operand.hbm [shape: f32[32], index: 0, kind: input, shape index: {}]
  %s1 = inlined_call_operand.vmem [shape: f32[4,32], index: 1, kind: output, shape index: {}]
  $region1: #{tile.18} parent=0
    #allocation0 [shape = 'u8[512]{0}', space=vmem, size = 0x400, scoped, tag = 'operand span for operand 0']
    #allocation1 [shape = 's32[1]{0}', space=sflag, size = 0x4, scoped, tag = 'scoped memory for tile.18']
    %2 = vsyncpa [#allocation1], 0
    // Predicated region
    $region2: #{tile.18} parent=1 // pred_check
      _
    $region3: #{tile.18} parent=1 // pred_check_branch
      %4 = sbr.rel (0) target = $region5
    $region4: #{tile.18} parent=1 // pred_region
      %s6 = ssub.s32 16, 16
      %7 = vsyncadd [#allocation1], %s6
      %s9 = sshll.u32 [#allocation0], 4
      %s10 = int_to_ptr.vmem [resolvable:$true] %s9
      %12 = dma.hbm_to_vmem [thread:$0]  %s0, 16, %s10, [#allocation1]
    $region5: #{tile.18} parent=1 // pred_fallthru
      _
    // Predicated region
    $region6: #{tile.18} parent=1 // pred_check
      _
    $region7: #{tile.18} parent=1 // pred_check_branch
      %14 = sbr.rel (0) target = $region9
    $region8: #{tile.18} parent=1 // pred_region
      %15 = dma.done [#allocation1], 16
    $region9: #{tile.18} parent=1 // pred_fallthru
      _
    %v16 = vld [vmem:[#allocation0] ss:$0 sm:$0xff]
    %17 = vst [vmem:[%s1] sm:$0xf] %v16
    %18 = vsyncpa [#allocation1], 1

// kernel: tile.19
$region0: #{tile.19}
  %s0 = inlined_call_operand.vmem [shape: f32[4,32], index: 0, kind: input, shape index: {}]
  %s1 = inlined_call_operand.vmem [shape: f32[1,128], index: 1, kind: output, shape index: {}]
  $region1: #{tile.19} parent=0
    #allocation0 [shape = 'u8[4096]{0}', space=vmem, size = 0x1000, scoped, tag = 'scoped mem for output reshape']
    #allocation1 [shape = 'u8[4096]{0}', space=vmem, size = 0x1000, scoped, tag = 'scoped mem for input reshape']
    %s3 = sshllo.u32 0, 4
    %v4 = vld [vmem:[%s0] sm:%s3]
    %5 = vst [vmem:[#allocation1] sm:%s3] %v4
    %v6 = vld [vmem:[#allocation1] sm:$0x1]
    %vm7 = vcmask 261120
    %8 = vst.msk [vmem:[#allocation0] sm:$0x1] %vm7, %v6
    %s9 = scalar_lea.vmem [#allocation1], 3
    %v10 = vld [vmem:[%s9] sm:$0x1]
    %11 = vrot.lane.b32.xlu0 %v10, 96
    %v12 = vpop.permute.xlu0 %11
    %vm13 = vcmask 1048320
    %14 = vst.msk [vmem:[#allocation0] sm:$0x1] %vm13, %v12
    %s15 = scalar_lea.vmem [#allocation1], 2
    %v16 = vld [vmem:[%s15] sm:$0x1]
    %17 = vrot.lane.b32.xlu0 %v16, 64
    %v18 = vpop.permute.xlu0 %17
    %vm19 = vcmask 785920
    %20 = vst.msk [vmem:[#allocation0] sm:$0x1] %vm19, %v18
    %s21 = scalar_lea.vmem [#allocation1], 1
    %v22 = vld [vmem:[%s21] sm:$0x1]
    %23 = vrot.lane.b32.xlu0 %v22, 32
    %v24 = vpop.permute.xlu0 %23
    %vm25 = vcmask 523520
    %26 = vst.msk [vmem:[#allocation0] sm:$0x1] %vm25, %v24
    %s28 = sshllo.u32 0, 1
    %v30 = vld [vmem:[#allocation0] sm:%s28]
    %s31 = sshllo.u32 0, 1
    %32 = vst [vmem:[%s1] sm:%s31] %v30

// kernel: tile.24
$region0: #{tile.24}
  %s0 = inlined_call_operand.vmem [shape: f32[16,16], index: 0, kind: input, shape index: {}]
  %s1 = inlined_call_operand.vmem [shape: f32[1,256], index: 1, kind: output, shape index: {}]
  $region1: #{tile.24} parent=0
    #allocation0 [shape = 'u8[8192]{0}', space=vmem, size = 0x2000, scoped, tag = 'scoped mem for output reshape']
    %s2 = smov 3
    %v3 = vld [vmem:[%s0] ss:$8 sm:%s2]
    %vm4 = vcmask 130048
    %5 = vst.msk [vmem:[#allocation0] ss:$8 sm:$0x3] %vm4, %v3
    %s6 = scalar_lea.vmem %s0, 7
    %s7 = smov 3
    %v8 = vld [vmem:[%s6] ss:$8 sm:%s7]
    %9 = vrot.lane.b32.xlu0 %v8, 112
    %v10 = vpop.permute.xlu0 %9
    %vm11 = vcmask 1048448
    %12 = vst.msk [vmem:[#allocation0] ss:$8 sm:$0x3] %vm11, %v10
    %s13 = scalar_lea.vmem %s0, 6
    %s14 = smov 3
    %v15 = vld [vmem:[%s13] ss:$8 sm:%s14]
    %16 = vrot.lane.b32.xlu0 %v15, 96
    %v17 = vpop.permute.xlu0 %16
    %vm18 = vcmask 917248
    %19 = vst.msk [vmem:[#allocation0] ss:$8 sm:$0x3] %vm18, %v17
    %s20 = scalar_lea.vmem %s0, 5
    %s21 = smov 3
    %v22 = vld [vmem:[%s20] ss:$8 sm:%s21]
    %23 = vrot.lane.b32.xlu0 %v22, 80
    %v24 = vpop.permute.xlu0 %23
    %vm25 = vcmask 786048
    %26 = vst.msk [vmem:[#allocation0] ss:$8 sm:$0x3] %vm25, %v24
    %s27 = scalar_lea.vmem %s0, 4
    %s28 = smov 3
    %v29 = vld [vmem:[%s27] ss:$8 sm:%s28]
    %30 = vrot.lane.b32.xlu0 %v29, 64
    %v31 = vpop.permute.xlu0 %30
    %vm32 = vcmask 654848
    %33 = vst.msk [vmem:[#allocation0] ss:$8 sm:$0x3] %vm32, %v31
    %s34 = scalar_lea.vmem %s0, 3
    %s35 = smov 3
    %v36 = vld [vmem:[%s34] ss:$8 sm:%s35]
    %37 = vrot.lane.b32.xlu0 %v36, 48
    %v38 = vpop.permute.xlu0 %37
    %vm39 = vcmask 523648
    %40 = vst.msk [vmem:[#allocation0] ss:$8 sm:$0x3] %vm39, %v38
    %s41 = scalar_lea.vmem %s0, 2
    %s42 = smov 3
    %v43 = vld [vmem:[%s41] ss:$8 sm:%s42]
    %44 = vrot.lane.b32.xlu0 %v43, 32
    %v45 = vpop.permute.xlu0 %44
    %vm46 = vcmask 392448
    %47 = vst.msk [vmem:[#allocation0] ss:$8 sm:$0x3] %vm46, %v45
    %s48 = scalar_lea.vmem %s0, 1
    %s49 = smov 3
    %v50 = vld [vmem:[%s48] ss:$8 sm:%s49]
    %51 = vrot.lane.b32.xlu0 %v50, 16
    %v52 = vpop.permute.xlu0 %51
    %vm53 = vcmask 261248
    %54 = vst.msk [vmem:[#allocation0] ss:$8 sm:$0x3] %vm53, %v52
    %s56 = sshllo.u32 0, 1
    %v58 = vld [vmem:[#allocation0] sm:%s56]
    %s59 = sshllo.u32 0, 1
    %60 = vst [vmem:[%s1] sm:%s59] %v58
    %s61 = scalar_lea.vmem [#allocation0], 8
    %v62 = vld [vmem:[%s61] sm:%s56]
    %s63 = sshllo.u32 0, 1
    %s64 = scalar_lea.vmem %s1, 1
    %65 = vst [vmem:[%s64] sm:%s63] %v62

// kernel: tile.23
$region0: #{tile.23}
  #allocation2 [shape = 's32[1]{0}', space=sflag, size = 0x4, scoped, tag = 'scoped memory for tile.23']
  %s0 = inlined_call_operand.hbm [shape: f32[16], index: 0, kind: input, shape index: {}]
  %s1 = inlined_call_operand.vmem [shape: f32[16,16], index: 1, kind: output, shape index: {}]
  $region1: #{tile.23} parent=0
    #allocation0 [shape = 'u8[512]{0}', space=vmem, size = 0x400, scoped, tag = 'operand span for operand 0']
    #allocation1 [shape = 's32[1]{0}', space=sflag, size = 0x4, scoped, tag = 'scoped memory for tile.23']
    %2 = vsyncpa [#allocation1], 0
    // Predicated region
    $region2: #{tile.23} parent=1 // pred_check
      _
    $region3: #{tile.23} parent=1 // pred_check_branch
      %4 = sbr.rel (0) target = $region5
    $region4: #{tile.23} parent=1 // pred_region
      %s6 = ssub.s32 16, 16
      %7 = vsyncadd [#allocation1], %s6
      %s9 = sshll.u32 [#allocation0], 4
      %s10 = int_to_ptr.vmem [resolvable:$true] %s9
      %12 = dma.hbm_to_vmem [thread:$0]  %s0, 16, %s10, [#allocation1]
    $region5: #{tile.23} parent=1 // pred_fallthru
      _
    // Predicated region
    $region6: #{tile.23} parent=1 // pred_check
      _
    $region7: #{tile.23} parent=1 // pred_check_branch
      %14 = sbr.rel (0) target = $region9
    $region8: #{tile.23} parent=1 // pred_region
      %15 = dma.done [#allocation1], 16
    $region9: #{tile.23} parent=1 // pred_fallthru
      _
    %v16 = vld [vmem:[#allocation0] ss:$0 sm:$0xff]
    %17 = vst [vmem:[%s1] sm:$0xff] %v16
    %s18 = scalar_lea.vmem %s1, 8
    %19 = vst [vmem:[%s18] sm:$0xff] %v16
    %20 = vsyncpa [#allocation1], 1

// kernel: tile.28
$region0: #{tile.28}
  #allocation0 [shape = 's32[1]{0}', space=sflag, size = 0x4, scoped, tag = 'scoped memory for tile.28']
  %s0 = inlined_call_operand.vmem [shape: f32[4], index: 0, kind: input, shape index: {}]
  %s1 = inlined_call_operand.vmem [shape: f32[64,4], index: 1, kind: output, shape index: {}]
  // Predicated region
  $region2: #{tile.28} parent=0 // pred_check
    _
  $region3: #{tile.28} parent=0 // pred_check_branch
    %3 = sbr.rel (0) target = $region5
  $region4: #{tile.28} parent=0 // pred_region
    _
  $region5: #{tile.28} parent=0 // pred_fallthru
    _
  %v4 = vld [vmem:[%s0] ss:$0 sm:$0xff]
  %5 = vst [vmem:[%s1] sm:$0xff] %v4
  %s6 = scalar_lea.vmem %s1, 8
  %7 = vst [vmem:[%s6] sm:$0xff] %v4
  %s8 = scalar_lea.vmem %s1, 16
  %9 = vst [vmem:[%s8] sm:$0xff] %v4
  %s10 = scalar_lea.vmem %s1, 24
  %11 = vst [vmem:[%s10] sm:$0xff] %v4
  %s12 = scalar_lea.vmem %s1, 32
  %13 = vst [vmem:[%s12] sm:$0xff] %v4
  %s14 = scalar_lea.vmem %s1, 40
  %15 = vst [vmem:[%s14] sm:$0xff] %v4
  %s16 = scalar_lea.vmem %s1, 48
  %17 = vst [vmem:[%s16] sm:$0xff] %v4
  %s18 = scalar_lea.vmem %s1, 56
  %19 = vst [vmem:[%s18] sm:$0xff] %v4

// kernel: tile.29
$region0: #{tile.29}
  %s0 = inlined_call_operand.vmem [shape: f32[64,4], index: 0, kind: input, shape index: {}]
  %s1 = inlined_call_operand.vmem [shape: f32[1,256], index: 1, kind: output, shape index: {}]
  $region1: #{tile.29} parent=0
    #allocation0 [shape = 'u8[8192]{0}', space=vmem, size = 0x2000, scoped, tag = 'scoped mem for output reshape']
    %v2 = vld [vmem:[%s0] sm:$0x1]
    %s3 = scalar_lea.vmem %s0, 31
    %v4 = vld [vmem:[%s3] sm:$0x2]
    %vm5 = vcmask 1041409
    %v6 = vsel %vm5, %v4, %v2
    %vm7 = vcmask 31744
    %8 = vst.msk [vmem:[#allocation0] ss:$8 sm:$0x3] %vm7, %v6
    %s9 = scalar_lea.vmem %s0, 31
    %v10 = vld [vmem:[%s9] sm:$0x1]
    %s11 = scalar_lea.vmem %s0, 62
    %v12 = vld [vmem:[%s11] sm:$0x2]
    %vm13 = vcmask 1041409
    %v14 = vsel %vm13, %v12, %v10
    %15 = vrot.lane.b32.xlu0 %v14, 124
    %v16 = vpop.permute.xlu0 %15
    %vm17 = vcmask 1048544
    %18 = vst.msk [vmem:[#allocation0] ss:$8 sm:$0x3] %vm17, %v16
    %s19 = scalar_lea.vmem %s0, 30
    %v20 = vld [vmem:[%s19] sm:$0x1]
    %s21 = scalar_lea.vmem %s0, 61
    %v22 = vld [vmem:[%s21] sm:$0x2]
    %vm23 = vcmask 1041409
    %v24 = vsel %vm23, %v22, %v20
    %25 = vrot.lane.b32.xlu0 %v24, 120
    %v26 = vpop.permute.xlu0 %25
    %vm27 = vcmask 1015744
    %28 = vst.msk [vmem:[#allocation0] ss:$8 sm:$0x3] %vm27, %v26
    %s29 = scalar_lea.vmem %s0, 29
    %v30 = vld [vmem:[%s29] sm:$0x1]
    %s31 = scalar_lea.vmem %s0, 60
    %v32 = vld [vmem:[%s31] sm:$0x2]
    %vm33 = vcmask 1041409
    %v34 = vsel %vm33, %v32, %v30
    %35 = vrot.lane.b32.xlu0 %v34, 116
    %v36 = vpop.permute.xlu0 %35
    %vm37 = vcmask 982944
    %38 = vst.msk [vmem:[#allocation0] ss:$8 sm:$0x3] %vm37, %v36
    %s39 = scalar_lea.vmem %s0, 28
    %v40 = vld [vmem:[%s39] sm:$0x1]
    %s41 = scalar_lea.vmem %s0, 59
    %v42 = vld [vmem:[%s41] sm:$0x2]
    %vm43 = vcmask 1041409
    %v44 = vsel %vm43, %v42, %v40
    %45 = vrot.lane.b32.xlu0 %v44, 112
    %v46 = vpop.permute.xlu0 %45
    %vm47 = vcmask 950144
    %48 = vst.msk [vmem:[#allocation0] ss:$8 sm:$0x3] %vm47, %v46
    %s49 = scalar_lea.vmem %s0, 27
    %v50 = vld [vmem:[%s49] sm:$0x1]
    %s51 = scalar_lea.vmem %s0, 58
    %v52 = vld [vmem:[%s51] sm:$0x2]
    %vm53 = vcmask 1041409
    %v54 = vsel %vm53, %v52, %v50
    %55 = vrot.lane.b32.xlu0 %v54, 108
    %v56 = vpop.permute.xlu0 %55
    %vm57 = vcmask 917344
    %58 = vst.msk [vmem:[#allocation0] ss:$8 sm:$0x3] %vm57, %v56
    %s59 = scalar_lea.vmem %s0, 26
    %v60 = vld [vmem:[%s59] sm:$0x1]
    %s61 = scalar_lea.vmem %s0, 57
    %v62 = vld [vmem:[%s61] sm:$0x2]
    %vm63 = vcmask 1041409
    %v64 = vsel %vm63, %v62, %v60
    %65 = vrot.lane.b32.xlu0 %v64, 104
    %v66 = vpop.permute.xlu0 %65
    %vm67 = vcmask 884544
    %68 = vst.msk [vmem:[#allocation0] ss:$8 sm:$0x3] %vm67, %v66
    %s69 = scalar_lea.vmem %s0, 25
    %v70 = vld [vmem:[%s69] sm:$0x1]
    %s71 = scalar_lea.vmem %s0, 56
    %v72 = vld [vmem:[%s71] sm:$0x2]
    %vm73 = vcmask 1041409
    %v74 = vsel %vm73, %v72, %v70
    %75 = vrot.lane.b32.xlu0 %v74, 100
    %v76 = vpop.permute.xlu0 %75
    %vm77 = vcmask 851744
    %78 = vst.msk [vmem:[#allocation0] ss:$8 sm:$0x3] %vm77, %v76
    %s79 = scalar_lea.vmem %s0, 24
    %v80 = vld [vmem:[%s79] sm:$0x1]
    %s81 = scalar_lea.vmem %s0, 55
    %v82 = vld [vmem:[%s81] sm:$0x2]
    %vm83 = vcmask 1041409
    %v84 = vsel %vm83, %v82, %v80
    %85 = vrot.lane.b32.xlu0 %v84, 96
    %v86 = vpop.permute.xlu0 %85
    %vm87 = vcmask 818944
    %88 = vst.msk [vmem:[#allocation0] ss:$8 sm:$0x3] %vm87, %v86
    %s89 = scalar_lea.vmem %s0, 23
    %v90 = vld [vmem:[%s89] sm:$0x1]
    %s91 = scalar_lea.vmem %s0, 54
    %v92 = vld [vmem:[%s91] sm:$0x2]
    %vm93 = vcmask 1041409
    %v94 = vsel %vm93, %v92, %v90
    %95 = vrot.lane.b32.xlu0 %v94, 92
    %v96 = vpop.permute.xlu0 %95
    %vm97 = vcmask 786144
    %98 = vst.msk [vmem:[#allocation0] ss:$8 sm:$0x3] %vm97, %v96
    %s99 = scalar_lea.vmem %s0, 22
    %v100 = vld [vmem:[%s99] sm:$0x1]
    %s101 = scalar_lea.vmem %s0, 53
    %v102 = vld [vmem:[%s101] sm:$0x2]
    %vm103 = vcmask 1041409
    %v104 = vsel %vm103, %v102, %v100
    %105 = vrot.lane.b32.xlu0 %v104, 88
    %v106 = vpop.permute.xlu0 %105
    %vm107 = vcmask 753344
    %108 = vst.msk [vmem:[#allocation0] ss:$8 sm:$0x3] %vm107, %v106
    %s109 = scalar_lea.vmem %s0, 21
    %v110 = vld [vmem:[%s109] sm:$0x1]
    %s111 = scalar_lea.vmem %s0, 52
    %v112 = vld [vmem:[%s111] sm:$0x2]
    %vm113 = vcmask 1041409
    %v114 = vsel %vm113, %v112, %v110
    %115 = vrot.lane.b32.xlu0 %v114, 84
    %v116 = vpop.permute.xlu0 %115
    %vm117 = vcmask 720544
    %118 = vst.msk [vmem:[#allocation0] ss:$8 sm:$0x3] %vm117, %v116
    %s119 = scalar_lea.vmem %s0, 20
    %v120 = vld [vmem:[%s119] sm:$0x1]
    %s121 = scalar_lea.vmem %s0, 51
    %v122 = vld [vmem:[%s121] sm:$0x2]
    %vm123 = vcmask 1041409
    %v124 = vsel %vm123, %v122, %v120
    %125 = vrot.lane.b32.xlu0 %v124, 80
    %v126 = vpop.permute.xlu0 %125
    %vm127 = vcmask 687744
    %128 = vst.msk [vmem:[#allocation0] ss:$8 sm:$0x3] %vm127, %v126
    %s129 = scalar_lea.vmem %s0, 19
    %v130 = vld [vmem:[%s129] sm:$0x1]
    %s131 = scalar_lea.vmem %s0, 50
    %v132 = vld [vmem:[%s131] sm:$0x2]
    %vm133 = vcmask 1041409
    %v134 = vsel %vm133, %v132, %v130
    %135 = vrot.lane.b32.xlu0 %v134, 76
    %v136 = vpop.permute.xlu0 %135
    %vm137 = vcmask 654944
    %138 = vst.msk [vmem:[#allocation0] ss:$8 sm:$0x3] %vm137, %v136
    %s139 = scalar_lea.vmem %s0, 18
    %v140 = vld [vmem:[%s139] sm:$0x1]
    %s141 = scalar_lea.vmem %s0, 49
    %v142 = vld [vmem:[%s141] sm:$0x2]
    %vm143 = vcmask 1041409
    %v144 = vsel %vm143, %v142, %v140
    %145 = vrot.lane.b32.xlu0 %v144, 72
    %v146 = vpop.permute.xlu0 %145
    %vm147 = vcmask 622144
    %148 = vst.msk [vmem:[#allocation0] ss:$8 sm:$0x3] %vm147, %v146
    %s149 = scalar_lea.vmem %s0, 17
    %v150 = vld [vmem:[%s149] sm:$0x1]
    %s151 = scalar_lea.vmem %s0, 48
    %v152 = vld [vmem:[%s151] sm:$0x2]
    %vm153 = vcmask 1041409
    %v154 = vsel %vm153, %v152, %v150
    %155 = vrot.lane.b32.xlu0 %v154, 68
    %v156 = vpop.permute.xlu0 %155
    %vm157 = vcmask 589344
    %158 = vst.msk [vmem:[#allocation0] ss:$8 sm:$0x3] %vm157, %v156
    %s159 = scalar_lea.vmem %s0, 16
    %v160 = vld [vmem:[%s159] sm:$0x1]
    %s161 = scalar_lea.vmem %s0, 47
    %v162 = vld [vmem:[%s161] sm:$0x2]
    %vm163 = vcmask 1041409
    %v164 = vsel %vm163, %v162, %v160
    %165 = vrot.lane.b32.xlu0 %v164, 64
    %v166 = vpop.permute.xlu0 %165
    %vm167 = vcmask 556544
    %168 = vst.msk [vmem:[#allocation0] ss:$8 sm:$0x3] %vm167, %v166
    %s169 = scalar_lea.vmem %s0, 15
    %v170 = vld [vmem:[%s169] sm:$0x1]
    %s171 = scalar_lea.vmem %s0, 46
    %v172 = vld [vmem:[%s171] sm:$0x2]
    %vm173 = vcmask 1041409
    %v174 = vsel %vm173, %v172, %v170
    %175 = vrot.lane.b32.xlu0 %v174, 60
    %v176 = vpop.permute.xlu0 %175
    %vm177 = vcmask 523744
    %178 = vst.msk [vmem:[#allocation0] ss:$8 sm:$0x3] %vm177, %v176
    %s179 = scalar_lea.vmem %s0, 14
    %v180 = vld [vmem:[%s179] sm:$0x1]
    %s181 = scalar_lea.vmem %s0, 45
    %v182 = vld [vmem:[%s181] sm:$0x2]
    %vm183 = vcmask 1041409
    %v184 = vsel %vm183, %v182, %v180
    %185 = vrot.lane.b32.xlu0 %v184, 56
    %v186 = vpop.permute.xlu0 %185
    %vm187 = vcmask 490944
    %188 = vst.msk [vmem:[#allocation0] ss:$8 sm:$0x3] %vm187, %v186
    %s189 = scalar_lea.vmem %s0, 13
    %v190 = vld [vmem:[%s189] sm:$0x1]
    %s191 = scalar_lea.vmem %s0, 44
    %v192 = vld [vmem:[%s191] sm:$0x2]
    %vm193 = vcmask 1041409
    %v194 = vsel %vm193, %v192, %v190
    %195 = vrot.lane.b32.xlu0 %v194, 52
    %v196 = vpop.permute.xlu0 %195
    %vm197 = vcmask 458144
    %198 = vst.msk [vmem:[#allocation0] ss:$8 sm:$0x3] %vm197, %v196
    %s199 = scalar_lea.vmem %s0, 12
    %v200 = vld [vmem:[%s199] sm:$0x1]
    %s201 = scalar_lea.vmem %s0, 43
    %v202 = vld [vmem:[%s201] sm:$0x2]
    %vm203 = vcmask 1041409
    %v204 = vsel %vm203, %v202, %v200
    %205 = vrot.lane.b32.xlu0 %v204, 48
    %v206 = vpop.permute.xlu0 %205
    %vm207 = vcmask 425344
    %208 = vst.msk [vmem:[#allocation0] ss:$8 sm:$0x3] %vm207, %v206
    %s209 = scalar_lea.vmem %s0, 11
    %v210 = vld [vmem:[%s209] sm:$0x1]
    %s211 = scalar_lea.vmem %s0, 42
    %v212 = vld [vmem:[%s211] sm:$0x2]
    %vm213 = vcmask 1041409
    %v214 = vsel %vm213, %v212, %v210
    %215 = vrot.lane.b32.xlu0 %v214, 44
    %v216 = vpop.permute.xlu0 %215
    %vm217 = vcmask 392544
    %218 = vst.msk [vmem:[#allocation0] ss:$8 sm:$0x3] %vm217, %v216
    %s219 = scalar_lea.vmem %s0, 10
    %v220 = vld [vmem:[%s219] sm:$0x1]
    %s221 = scalar_lea.vmem %s0, 41
    %v222 = vld [vmem:[%s221] sm:$0x2]
    %vm223 = vcmask 1041409
    %v224 = vsel %vm223, %v222, %v220
    %225 = vrot.lane.b32.xlu0 %v224, 40
    %v226 = vpop.permute.xlu0 %225
    %vm227 = vcmask 359744
    %228 = vst.msk [vmem:[#allocation0] ss:$8 sm:$0x3] %vm227, %v226
    %s229 = scalar_lea.vmem %s0, 9
    %v230 = vld [vmem:[%s229] sm:$0x1]
    %s231 = scalar_lea.vmem %s0, 40
    %v232 = vld [vmem:[%s231] sm:$0x2]
    %vm233 = vcmask 1041409
    %v234 = vsel %vm233, %v232, %v230
    %235 = vrot.lane.b32.xlu0 %v234, 36
    %v236 = vpop.permute.xlu0 %235
    %vm237 = vcmask 326944
    %238 = vst.msk [vmem:[#allocation0] ss:$8 sm:$0x3] %vm237, %v236
    %s239 = scalar_lea.vmem %s0, 8
    %v240 = vld [vmem:[%s239] sm:$0x1]
    %s241 = scalar_lea.vmem %s0, 39
    %v242 = vld [vmem:[%s241] sm:$0x2]
    %vm243 = vcmask 1041409
    %v244 = vsel %vm243, %v242, %v240
    %245 = vrot.lane.b32.xlu0 %v244, 32
    %v246 = vpop.permute.xlu0 %245
    %vm247 = vcmask 294144
    %248 = vst.msk [vmem:[#allocation0] ss:$8 sm:$0x3] %vm247, %v246
    %s249 = scalar_lea.vmem %s0, 7
    %v250 = vld [vmem:[%s249] sm:$0x1]
    %s251 = scalar_lea.vmem %s0, 38
    %v252 = vld [vmem:[%s251] sm:$0x2]
    %vm253 = vcmask 1041409
    %v254 = vsel %vm253, %v252, %v250
    %255 = vrot.lane.b32.xlu0 %v254, 28
    %v256 = vpop.permute.xlu0 %255
    %vm257 = vcmask 261344
    %258 = vst.msk [vmem:[#allocation0] ss:$8 sm:$0x3] %vm257, %v256
    %s259 = scalar_lea.vmem %s0, 6
    %v260 = vld [vmem:[%s259] sm:$0x1]
    %s261 = scalar_lea.vmem %s0, 37
    %v262 = vld [vmem:[%s261] sm:$0x2]
    %vm263 = vcmask 1041409
    %v264 = vsel %vm263, %v262, %v260
    %265 = vrot.lane.b32.xlu0 %v264, 24
    %v266 = vpop.permute.xlu0 %265
    %vm267 = vcmask 228544
    %268 = vst.msk [vmem:[#allocation0] ss:$8 sm:$0x3] %vm267, %v266
    %s269 = scalar_lea.vmem %s0, 5
    %v270 = vld [vmem:[%s269] sm:$0x1]
    %s271 = scalar_lea.vmem %s0, 36
    %v272 = vld [vmem:[%s271] sm:$0x2]
    %vm273 = vcmask 1041409
    %v274 = vsel %vm273, %v272, %v270
    %275 = vrot.lane.b32.xlu0 %v274, 20
    %v276 = vpop.permute.xlu0 %275
    %vm277 = vcmask 195744
    %278 = vst.msk [vmem:[#allocation0] ss:$8 sm:$0x3] %vm277, %v276
    %s279 = scalar_lea.vmem %s0, 4
    %v280 = vld [vmem:[%s279] sm:$0x1]
    %s281 = scalar_lea.vmem %s0, 35
    %v282 = vld [vmem:[%s281] sm:$0x2]
    %vm283 = vcmask 1041409
    %v284 = vsel %vm283, %v282, %v280
    %285 = vrot.lane.b32.xlu0 %v284, 16
    %v286 = vpop.permute.xlu0 %285
    %vm287 = vcmask 162944
    %288 = vst.msk [vmem:[#allocation0] ss:$8 sm:$0x3] %vm287, %v286
    %s289 = scalar_lea.vmem %s0, 3
    %v290 = vld [vmem:[%s289] sm:$0x1]
    %s291 = scalar_lea.vmem %s0, 34
    %v292 = vld [vmem:[%s291] sm:$0x2]
    %vm293 = vcmask 1041409
    %v294 = vsel %vm293, %v292, %v290
    %295 = vrot.lane.b32.xlu0 %v294, 12
    %v296 = vpop.permute.xlu0 %295
    %vm297 = vcmask 130144
    %298 = vst.msk [vmem:[#allocation0] ss:$8 sm:$0x3] %vm297, %v296
    %s299 = scalar_lea.vmem %s0, 2
    %v300 = vld [vmem:[%s299] sm:$0x1]
    %s301 = scalar_lea.vmem %s0, 33
    %v302 = vld [vmem:[%s301] sm:$0x2]
    %vm303 = vcmask 1041409
    %v304 = vsel %vm303, %v302, %v300
    %305 = vrot.lane.b32.xlu0 %v304, 8
    %v306 = vpop.permute.xlu0 %305
    %vm307 = vcmask 97344
    %308 = vst.msk [vmem:[#allocation0] ss:$8 sm:$0x3] %vm307, %v306
    %s309 = scalar_lea.vmem %s0, 1
    %v310 = vld [vmem:[%s309] sm:$0x1]
    %s311 = scalar_lea.vmem %s0, 32
    %v312 = vld [vmem:[%s311] sm:$0x2]
    %vm313 = vcmask 1041409
    %v314 = vsel %vm313, %v312, %v310
    %315 = vrot.lane.b32.xlu0 %v314, 4
    %v316 = vpop.permute.xlu0 %315
    %vm317 = vcmask 64544
    %318 = vst.msk [vmem:[#allocation0] ss:$8 sm:$0x3] %vm317, %v316
    %s320 = sshllo.u32 0, 1
    %v322 = vld [vmem:[#allocation0] sm:%s320]
    %s323 = sshllo.u32 0, 1
    %324 = vst [vmem:[%s1] sm:%s323] %v322
    %s325 = scalar_lea.vmem [#allocation0], 8
    %v326 = vld [vmem:[%s325] sm:%s320]
    %s327 = sshllo.u32 0, 1
    %s328 = scalar_lea.vmem %s1, 1
    %329 = vst [vmem:[%s328] sm:%s327] %v326

// kernel: conv_decoder.1
$region0: #{conv_decoder.1}
  #allocation0 [shape = 'u32[]', space=smem, size = 0x4, offset = 0x4, fixed_abs, tag = 'smem constant byte address 0x4 - core index']
  #allocation1 [shape = 'u32[144,128]{1,0:T(1,128)}', space=vmem, size = 0x12000, scoped, tag = 'internal scratch']
  %s0 = inlined_call_operand.vmem [shape: bf16[512,64], index: 0, kind: input, shape index: {}]
  %s1 = inlined_call_operand.vmem [shape: bf16[64,128], index: 1, kind: input, shape index: {}]
  %s2 = inlined_call_operand.vmem [shape: f32[1,128], index: 2, kind: input, shape index: {}]
  %s3 = inlined_call_operand.vmem [shape: bf16[128,256], index: 3, kind: input, shape index: {}]
  %s4 = inlined_call_operand.vmem [shape: f32[1,256], index: 4, kind: input, shape index: {}]
  %s5 = inlined_call_operand.vmem [shape: bf16[256,256], index: 5, kind: input, shape index: {}]
  %s6 = inlined_call_operand.vmem [shape: f32[1,256], index: 6, kind: input, shape index: {}]
  %s7 = inlined_call_operand.vmem [shape: bf16[512,256], index: 7, kind: output, shape index: {}]
  %s8 = sld [smem:[#allocation0]]
  $region38: #{conv_decoder.1} parent=0
    _
  %s10 = ssub.s32 1, %s8
  %s11 = scalar_select 0, %s10, %s8
  // Predicated region
  $region2: #{conv_decoder.1} parent=0 // pred_check
    _
  $region3: #{conv_decoder.1} parent=0 // pred_check_branch
    %13 = sbr.rel (0) target = $region5
  $region4: #{conv_decoder.1} parent=0 // pred_region
    _
  $region5: #{conv_decoder.1} parent=0 // pred_fallthru
    _
  // Predicated region
  $region6: #{conv_decoder.1} parent=0 // pred_check
    _
  $region7: #{conv_decoder.1} parent=0 // pred_check_branch
    %15 = sbr.rel (0) target = $region9
  $region8: #{conv_decoder.1} parent=0 // pred_region
    _
  $region9: #{conv_decoder.1} parent=0 // pred_fallthru
    _
  // Predicated region
  $region10: #{conv_decoder.1} parent=0 // pred_check
    _
  $region11: #{conv_decoder.1} parent=0 // pred_check_branch
    %17 = sbr.rel (0) target = $region13
  $region12: #{conv_decoder.1} parent=0 // pred_region
    _
  $region13: #{conv_decoder.1} parent=0 // pred_fallthru
    _
  // Predicated region
  $region14: #{conv_decoder.1} parent=0 // pred_check
    _
  $region15: #{conv_decoder.1} parent=0 // pred_check_branch
    %19 = sbr.rel (0) target = $region17
  $region16: #{conv_decoder.1} parent=0 // pred_region
    _
  $region17: #{conv_decoder.1} parent=0 // pred_fallthru
    _
  // Predicated region
  $region18: #{conv_decoder.1} parent=0 // pred_check
    _
  $region19: #{conv_decoder.1} parent=0 // pred_check_branch
    %21 = sbr.rel (0) target = $region21
  $region20: #{conv_decoder.1} parent=0 // pred_region
    _
  $region21: #{conv_decoder.1} parent=0 // pred_fallthru
    _
  // Predicated region
  $region22: #{conv_decoder.1} parent=0 // pred_check
    _
  $region23: #{conv_decoder.1} parent=0 // pred_check_branch
    %23 = sbr.rel (0) target = $region25
  $region24: #{conv_decoder.1} parent=0 // pred_region
    _
  $region25: #{conv_decoder.1} parent=0 // pred_fallthru
    _
  // Predicated region
  $region26: #{conv_decoder.1} parent=0 // pred_check
    _
  $region27: #{conv_decoder.1} parent=0 // pred_check_branch
    %25 = sbr.rel (0) target = $region29
  $region28: #{conv_decoder.1} parent=0 // pred_region
    _
  $region29: #{conv_decoder.1} parent=0 // pred_fallthru
    _
  %v27 = vld [vmem:[%s0] sm:$0xf]
  %v28 = vld [vmem:[%s0 + $0x4] sm:$0xf]
  %v29 = vld [vmem:[%s0 + $0x8] sm:$0xf]
  %v30 = vld [vmem:[%s0 + $0xc] sm:$0xf]
  %v31 = vld [vmem:[%s0 + $0x10] sm:$0xf]
  %v32 = vld [vmem:[%s0 + $0x14] sm:$0xf]
  %v33 = vld [vmem:[%s0 + $0x18] sm:$0xf]
  %v34 = vld [vmem:[%s0 + $0x1c] sm:$0xf]
  %v35 = vld [vmem:[%s0 + $0x20] sm:$0xf]
  %v36 = vld [vmem:[%s0 + $0x24] sm:$0xf]
  %v37 = vld [vmem:[%s0 + $0x28] sm:$0xf]
  %v38 = vld [vmem:[%s0 + $0x2c] sm:$0xf]
  %v39 = vld [vmem:[%s0 + $0x30] sm:$0xf]
  %v40 = vld [vmem:[%s0 + $0x34] sm:$0xf]
  %v41 = vld [vmem:[%s0 + $0x38] sm:$0xf]
  %v42 = vld [vmem:[%s0 + $0x3c] sm:$0xf]
  %v43 = vld [vmem:[%s0 + $0x40] sm:$0xf]
  %v44 = vld [vmem:[%s0 + $0x44] sm:$0xf]
  %v45 = vld [vmem:[%s0 + $0x48] sm:$0xf]
  %v46 = vld [vmem:[%s0 + $0x4c] sm:$0xf]
  %v47 = vld [vmem:[%s0 + $0x50] sm:$0xf]
  %v48 = vld [vmem:[%s0 + $0x54] sm:$0xf]
  %v49 = vld [vmem:[%s0 + $0x58] sm:$0xf]
  %v50 = vld [vmem:[%s0 + $0x5c] sm:$0xf]
  %v51 = vld [vmem:[%s0 + $0x60] sm:$0xf]
  %v52 = vld [vmem:[%s0 + $0x64] sm:$0xf]
  %v53 = vld [vmem:[%s0 + $0x68] sm:$0xf]
  %v54 = vld [vmem:[%s0 + $0x6c] sm:$0xf]
  %v55 = vld [vmem:[%s0 + $0x70] sm:$0xf]
  %v56 = vld [vmem:[%s0 + $0x74] sm:$0xf]
  %v57 = vld [vmem:[%s0 + $0x78] sm:$0xf]
  %v58 = vld [vmem:[%s0 + $0x7c] sm:$0xf]
  %v59 = vld [vmem:[%s0 + $0x80] sm:$0xf]
  %v60 = vld [vmem:[%s0 + $0x84] sm:$0xf]
  %v61 = vld [vmem:[%s0 + $0x88] sm:$0xf]
  %v62 = vld [vmem:[%s0 + $0x8c] sm:$0xf]
  %v63 = vld [vmem:[%s0 + $0x90] sm:$0xf]
  %v64 = vld [vmem:[%s0 + $0x94] sm:$0xf]
  %v65 = vld [vmem:[%s0 + $0x98] sm:$0xf]
  %v66 = vld [vmem:[%s0 + $0x9c] sm:$0xf]
  %v67 = vld [vmem:[%s0 + $0xa0] sm:$0xf]
  %v68 = vld [vmem:[%s0 + $0xa4] sm:$0xf]
  %v69 = vld [vmem:[%s0 + $0xa8] sm:$0xf]
  %v70 = vld [vmem:[%s0 + $0xac] sm:$0xf]
  %v71 = vld [vmem:[%s0 + $0xb0] sm:$0xf]
  %v72 = vld [vmem:[%s0 + $0xb4] sm:$0xf]
  %v73 = vld [vmem:[%s0 + $0xb8] sm:$0xf]
  %v74 = vld [vmem:[%s0 + $0xbc] sm:$0xf]
  %v75 = vld [vmem:[%s0 + $0xc0] sm:$0xf]
  %v76 = vld [vmem:[%s0 + $0xc4] sm:$0xf]
  %v77 = vld [vmem:[%s0 + $0xc8] sm:$0xf]
  %v78 = vld [vmem:[%s0 + $0xcc] sm:$0xf]
  %v79 = vld [vmem:[%s0 + $0xd0] sm:$0xf]
  %v80 = vld [vmem:[%s0 + $0xd4] sm:$0xf]
  %v81 = vld [vmem:[%s0 + $0xd8] sm:$0xf]
  %v82 = vld [vmem:[%s0 + $0xdc] sm:$0xf]
  %v83 = vld [vmem:[%s0 + $0xe0] sm:$0xf]
  %v84 = vld [vmem:[%s0 + $0xe4] sm:$0xf]
  %v85 = vld [vmem:[%s0 + $0xe8] sm:$0xf]
  %v86 = vld [vmem:[%s0 + $0xec] sm:$0xf]
  %v87 = vld [vmem:[%s0 + $0xf0] sm:$0xf]
  %v88 = vld [vmem:[%s0 + $0xf4] sm:$0xf]
  %v89 = vld [vmem:[%s0 + $0xf8] sm:$0xf]
  %v90 = vld [vmem:[%s0 + $0xfc] sm:$0xf]
  %v91 = vld [vmem:[%s1] sm:$0xf]
  %v92 = vld [vmem:[%s1 + $0x4] sm:$0xf]
  %v93 = vld [vmem:[%s1 + $0x8] sm:$0xf]
  %v94 = vld [vmem:[%s1 + $0xc] sm:$0xf]
  %v95 = vld [vmem:[%s1 + $0x10] sm:$0xf]
  %v96 = vld [vmem:[%s1 + $0x14] sm:$0xf]
  %v97 = vld [vmem:[%s1 + $0x18] sm:$0xf]
  %v98 = vld [vmem:[%s1 + $0x1c] sm:$0xf]
  %v99 = vld [vmem:[%s2] sm:$0x1]
  %v101 = vlaneseq
  %v102 = vshrl.u32 %v101, 7
  %v103 = vsub.s32 0, %v102
  %v104 = vrot.slane %v99, %v103
  %v170 = vunpack.c.l.b16 %v27
  %v171 = vunpack.c.l.b16 %v28
  %v172 = vunpack.c.l.b16 %v29
  %v173 = vunpack.c.l.b16 %v30
  %v174 = vunpack.c.l.b16 %v31
  %v175 = vunpack.c.l.b16 %v32
  %v176 = vunpack.c.l.b16 %v33
  %v177 = vunpack.c.l.b16 %v34
  %v178 = vunpack.c.l.b16 %v35
  %v179 = vunpack.c.l.b16 %v36
  %v180 = vunpack.c.l.b16 %v37
  %v181 = vunpack.c.l.b16 %v38
  %v182 = vunpack.c.l.b16 %v39
  %v183 = vunpack.c.l.b16 %v40
  %v184 = vunpack.c.l.b16 %v41
  %v185 = vunpack.c.l.b16 %v42
  %v186 = vunpack.c.l.b16 %v43
  %v187 = vunpack.c.l.b16 %v44
  %v188 = vunpack.c.l.b16 %v45
  %v189 = vunpack.c.l.b16 %v46
  %v190 = vunpack.c.l.b16 %v47
  %v191 = vunpack.c.l.b16 %v48
  %v192 = vunpack.c.l.b16 %v49
  %v193 = vunpack.c.l.b16 %v50
  %v194 = vunpack.c.l.b16 %v51
  %v195 = vunpack.c.l.b16 %v52
  %v196 = vunpack.c.l.b16 %v53
  %v197 = vunpack.c.l.b16 %v54
  %v198 = vunpack.c.l.b16 %v55
  %v199 = vunpack.c.l.b16 %v56
  %v200 = vunpack.c.l.b16 %v57
  %v201 = vunpack.c.l.b16 %v58
  %v202 = vunpack.c.l.b16 %v59
  %v203 = vunpack.c.l.b16 %v60
  %v204 = vunpack.c.l.b16 %v61
  %v205 = vunpack.c.l.b16 %v62
  %v206 = vunpack.c.l.b16 %v63
  %v207 = vunpack.c.l.b16 %v64
  %v208 = vunpack.c.l.b16 %v65
  %v209 = vunpack.c.l.b16 %v66
  %v210 = vunpack.c.l.b16 %v67
  %v211 = vunpack.c.l.b16 %v68
  %v212 = vunpack.c.l.b16 %v69
  %v213 = vunpack.c.l.b16 %v70
  %v214 = vunpack.c.l.b16 %v71
  %v215 = vunpack.c.l.b16 %v72
  %v216 = vunpack.c.l.b16 %v73
  %v217 = vunpack.c.l.b16 %v74
  %v218 = vunpack.c.l.b16 %v75
  %v219 = vunpack.c.l.b16 %v76
  %v220 = vunpack.c.l.b16 %v77
  %v221 = vunpack.c.l.b16 %v78
  %v222 = vunpack.c.l.b16 %v79
  %v223 = vunpack.c.l.b16 %v80
  %v224 = vunpack.c.l.b16 %v81
  %v225 = vunpack.c.l.b16 %v82
  %v226 = vunpack.c.l.b16 %v83
  %v227 = vunpack.c.l.b16 %v84
  %v228 = vunpack.c.l.b16 %v85
  %v229 = vunpack.c.l.b16 %v86
  %v230 = vunpack.c.l.b16 %v87
  %v231 = vunpack.c.l.b16 %v88
  %v232 = vunpack.c.l.b16 %v89
  %v233 = vunpack.c.l.b16 %v90
  %v234 = vpack.c.b16 %v171, %v170
  %v235 = vpack.c.b16 %v173, %v172
  %v236 = vpack.c.b16 %v175, %v174
  %v237 = vpack.c.b16 %v177, %v176
  %v238 = vpack.c.b16 %v179, %v178
  %v239 = vpack.c.b16 %v181, %v180
  %v240 = vpack.c.b16 %v183, %v182
  %v241 = vpack.c.b16 %v185, %v184
  %v242 = vpack.c.b16 %v187, %v186
  %v243 = vpack.c.b16 %v189, %v188
  %v244 = vpack.c.b16 %v191, %v190
  %v245 = vpack.c.b16 %v193, %v192
  %v246 = vpack.c.b16 %v195, %v194
  %v247 = vpack.c.b16 %v197, %v196
  %v248 = vpack.c.b16 %v199, %v198
  %v249 = vpack.c.b16 %v201, %v200
  %v250 = vpack.c.b16 %v203, %v202
  %v251 = vpack.c.b16 %v205, %v204
  %v252 = vpack.c.b16 %v207, %v206
  %v253 = vpack.c.b16 %v209, %v208
  %v254 = vpack.c.b16 %v211, %v210
  %v255 = vpack.c.b16 %v213, %v212
  %v256 = vpack.c.b16 %v215, %v214
  %v257 = vpack.c.b16 %v217, %v216
  %v258 = vpack.c.b16 %v219, %v218
  %v259 = vpack.c.b16 %v221, %v220
  %v260 = vpack.c.b16 %v223, %v222
  %v261 = vpack.c.b16 %v225, %v224
  %v262 = vpack.c.b16 %v227, %v226
  %v263 = vpack.c.b16 %v229, %v228
  %v264 = vpack.c.b16 %v231, %v230
  %v265 = vpack.c.b16 %v233, %v232
  %v274 = vunpack.c.l.b16 %v91
  %v275 = vunpack.c.l.b16 %v92
  %v276 = vunpack.c.l.b16 %v93
  %v277 = vunpack.c.l.b16 %v94
  %v278 = vunpack.c.l.b16 %v95
  %v279 = vunpack.c.l.b16 %v96
  %v280 = vunpack.c.l.b16 %v97
  %v281 = vunpack.c.l.b16 %v98
  %v282 = vpack.c.b16 %v275, %v274
  %v283 = vpack.c.b16 %v277, %v276
  %v284 = vpack.c.b16 %v279, %v278
  %v285 = vpack.c.b16 %v281, %v280
  %vm290 = vcmask 523264
  %v292 = vsel %vm290, %v234, 0
  %v295 = vsel %vm290, %v235, 0
  %v298 = vsel %vm290, %v236, 0
  %v301 = vsel %vm290, %v237, 0
  %v304 = vsel %vm290, %v238, 0
  %v307 = vsel %vm290, %v239, 0
  %v310 = vsel %vm290, %v240, 0
  %v313 = vsel %vm290, %v241, 0
  %v316 = vsel %vm290, %v242, 0
  %v319 = vsel %vm290, %v243, 0
  %v322 = vsel %vm290, %v244, 0
  %v325 = vsel %vm290, %v245, 0
  %v328 = vsel %vm290, %v246, 0
  %v331 = vsel %vm290, %v247, 0
  %v334 = vsel %vm290, %v248, 0
  %v337 = vsel %vm290, %v249, 0
  %v340 = vsel %vm290, %v250, 0
  %v343 = vsel %vm290, %v251, 0
  %v346 = vsel %vm290, %v252, 0
  %v349 = vsel %vm290, %v253, 0
  %v352 = vsel %vm290, %v254, 0
  %v355 = vsel %vm290, %v255, 0
  %v358 = vsel %vm290, %v256, 0
  %v361 = vsel %vm290, %v257, 0
  %v364 = vsel %vm290, %v258, 0
  %v367 = vsel %vm290, %v259, 0
  %v370 = vsel %vm290, %v260, 0
  %v373 = vsel %vm290, %v261, 0
  %v376 = vsel %vm290, %v262, 0
  %v379 = vsel %vm290, %v263, 0
  %v382 = vsel %vm290, %v264, 0
  %v385 = vsel %vm290, %v265, 0
  %387 = vmatprep.subr.bf16.mxu0 0
  %388 = vmatpush1.bf16.msra.mxu0 %v282
  %389 = vmatprep.subr.bf16.mxu0 0
  %390 = vmatpush1.bf16.msra.mxu0 %v283
  %391 = vmatprep.subr.bf16.mxu0 0
  %392 = vmatpush1.bf16.msra.mxu0 %v284
  %393 = vmatprep.subr.bf16.mxu0 0
  %394 = vmatpush1.bf16.msra.mxu0 %v285
  %395 = vmatprep.subr.bf16.mxu0 0
  %396 = vmatpush1.bf16.msra.mxu0 0
  %397 = vmatprep.subr.bf16.mxu0 0
  %398 = vmatpush1.bf16.msra.mxu0 0
  %399 = vmatprep.subr.bf16.mxu0 0
  %400 = vmatpush1.bf16.msra.mxu0 0
  %401 = vmatprep.subr.bf16.mxu0 0
  %402 = vmatpush1.bf16.msra.mxu0 0
  %403 = vmatprep.subr.bf16.mxu0 0
  %404 = vmatpush1.bf16.msra.mxu0 0
  %405 = vmatprep.subr.bf16.mxu0 0
  %406 = vmatpush1.bf16.msra.mxu0 0
  %407 = vmatprep.subr.bf16.mxu0 0
  %408 = vmatpush1.bf16.msra.mxu0 0
  %409 = vmatprep.subr.bf16.mxu0 0
  %410 = vmatpush1.bf16.msra.mxu0 0
  %411 = vmatprep.subr.bf16.mxu0 0
  %412 = vmatpush1.bf16.msra.mxu0 0
  %413 = vmatprep.subr.bf16.mxu0 0
  %414 = vmatpush1.bf16.msra.mxu0 0
  %415 = vmatprep.subr.bf16.mxu0 0
  %416 = vmatpush1.bf16.msra.mxu0 0
  %417 = vmatprep.subr.bf16.mxu0 0
  %418 = vmatpush1.bf16.msra.mxu0 0
  %419 = vmatprep.mubr.bf16.mxu0 0
  %420 = vmatmul.mubr.bf16.gmra.mrb[0].mxu0 %v292
  %v421 = vpop.f32.mrb[0].mxu0
  %v422 = vadd.f32 %v104, %v421
  %v423 = vpop.f32.mrb[0].mxu0
  %v424 = vpop.f32.mrb[0].mxu0
  %v425 = vadd.f32 %v104, %v424
  %v426 = vpop.f32.mrb[0].mxu0
  %427 = vmatprep.mubr.bf16.mxu0 0
  %428 = vmatmul.mubr.bf16.gmra.mrb[0].mxu0 %v295
  %v429 = vpop.f32.mrb[0].mxu0
  %v430 = vadd.f32 %v104, %v429
  %v431 = vpop.f32.mrb[0].mxu0
  %v432 = vpop.f32.mrb[0].mxu0
  %v433 = vadd.f32 %v104, %v432
  %v434 = vpop.f32.mrb[0].mxu0
  %435 = vmatprep.mubr.bf16.mxu0 0
  %436 = vmatmul.mubr.bf16.gmra.mrb[0].mxu0 %v298
  %v437 = vpop.f32.mrb[0].mxu0
  %v438 = vadd.f32 %v104, %v437
  %v439 = vpop.f32.mrb[0].mxu0
  %v440 = vpop.f32.mrb[0].mxu0
  %v441 = vadd.f32 %v104, %v440
  %v442 = vpop.f32.mrb[0].mxu0
  %443 = vmatprep.mubr.bf16.mxu0 0
  %444 = vmatmul.mubr.bf16.gmra.mrb[0].mxu0 %v301
  %v445 = vpop.f32.mrb[0].mxu0
  %v446 = vadd.f32 %v104, %v445
  %v447 = vpop.f32.mrb[0].mxu0
  %v448 = vpop.f32.mrb[0].mxu0
  %v449 = vadd.f32 %v104, %v448
  %v450 = vpop.f32.mrb[0].mxu0
  %451 = vmatprep.mubr.bf16.mxu0 0
  %452 = vmatmul.mubr.bf16.gmra.mrb[0].mxu0 %v304
  %v453 = vpop.f32.mrb[0].mxu0
  %v454 = vadd.f32 %v104, %v453
  %v455 = vpop.f32.mrb[0].mxu0
  %v456 = vpop.f32.mrb[0].mxu0
  %v457 = vadd.f32 %v104, %v456
  %v458 = vpop.f32.mrb[0].mxu0
  %459 = vmatprep.mubr.bf16.mxu0 0
  %460 = vmatmul.mubr.bf16.gmra.mrb[0].mxu0 %v307
  %v461 = vpop.f32.mrb[0].mxu0
  %v462 = vadd.f32 %v104, %v461
  %v463 = vpop.f32.mrb[0].mxu0
  %v464 = vpop.f32.mrb[0].mxu0
  %v465 = vadd.f32 %v104, %v464
  %v466 = vpop.f32.mrb[0].mxu0
  %467 = vmatprep.mubr.bf16.mxu0 0
  %468 = vmatmul.mubr.bf16.gmra.mrb[0].mxu0 %v310
  %v469 = vpop.f32.mrb[0].mxu0
  %v470 = vadd.f32 %v104, %v469
  %v471 = vpop.f32.mrb[0].mxu0
  %v472 = vpop.f32.mrb[0].mxu0
  %v473 = vadd.f32 %v104, %v472
  %v474 = vpop.f32.mrb[0].mxu0
  %475 = vmatprep.mubr.bf16.mxu0 0
  %476 = vmatmul.mubr.bf16.gmra.mrb[0].mxu0 %v313
  %v477 = vpop.f32.mrb[0].mxu0
  %v478 = vadd.f32 %v104, %v477
  %v479 = vpop.f32.mrb[0].mxu0
  %v480 = vpop.f32.mrb[0].mxu0
  %v481 = vadd.f32 %v104, %v480
  %v482 = vpop.f32.mrb[0].mxu0
  %483 = vmatprep.mubr.bf16.mxu0 0
  %484 = vmatmul.mubr.bf16.gmra.mrb[0].mxu0 %v316
  %v485 = vpop.f32.mrb[0].mxu0
  %v486 = vadd.f32 %v104, %v485
  %v487 = vpop.f32.mrb[0].mxu0
  %v488 = vpop.f32.mrb[0].mxu0
  %v489 = vadd.f32 %v104, %v488
  %v490 = vpop.f32.mrb[0].mxu0
  %491 = vmatprep.mubr.bf16.mxu0 0
  %492 = vmatmul.mubr.bf16.gmra.mrb[0].mxu0 %v319
  %v493 = vpop.f32.mrb[0].mxu0
  %v494 = vadd.f32 %v104, %v493
  %v495 = vpop.f32.mrb[0].mxu0
  %v496 = vpop.f32.mrb[0].mxu0
  %v497 = vadd.f32 %v104, %v496
  %v498 = vpop.f32.mrb[0].mxu0
  %499 = vmatprep.mubr.bf16.mxu0 0
  %500 = vmatmul.mubr.bf16.gmra.mrb[0].mxu0 %v322
  %v501 = vpop.f32.mrb[0].mxu0
  %v502 = vadd.f32 %v104, %v501
  %v503 = vpop.f32.mrb[0].mxu0
  %v504 = vpop.f32.mrb[0].mxu0
  %v505 = vadd.f32 %v104, %v504
  %v506 = vpop.f32.mrb[0].mxu0
  %507 = vmatprep.mubr.bf16.mxu0 0
  %508 = vmatmul.mubr.bf16.gmra.mrb[0].mxu0 %v325
  %v509 = vpop.f32.mrb[0].mxu0
  %v510 = vadd.f32 %v104, %v509
  %v511 = vpop.f32.mrb[0].mxu0
  %v512 = vpop.f32.mrb[0].mxu0
  %v513 = vadd.f32 %v104, %v512
  %v514 = vpop.f32.mrb[0].mxu0
  %515 = vmatprep.mubr.bf16.mxu0 0
  %516 = vmatmul.mubr.bf16.gmra.mrb[0].mxu0 %v328
  %v517 = vpop.f32.mrb[0].mxu0
  %v518 = vadd.f32 %v104, %v517
  %v519 = vpop.f32.mrb[0].mxu0
  %v520 = vpop.f32.mrb[0].mxu0
  %v521 = vadd.f32 %v104, %v520
  %v522 = vpop.f32.mrb[0].mxu0
  %523 = vmatprep.mubr.bf16.mxu0 0
  %524 = vmatmul.mubr.bf16.gmra.mrb[0].mxu0 %v331
  %v525 = vpop.f32.mrb[0].mxu0
  %v526 = vadd.f32 %v104, %v525
  %v527 = vpop.f32.mrb[0].mxu0
  %v528 = vpop.f32.mrb[0].mxu0
  %v529 = vadd.f32 %v104, %v528
  %v530 = vpop.f32.mrb[0].mxu0
  %531 = vmatprep.mubr.bf16.mxu0 0
  %532 = vmatmul.mubr.bf16.gmra.mrb[0].mxu0 %v334
  %v533 = vpop.f32.mrb[0].mxu0
  %v534 = vadd.f32 %v104, %v533
  %v535 = vpop.f32.mrb[0].mxu0
  %v536 = vpop.f32.mrb[0].mxu0
  %v537 = vadd.f32 %v104, %v536
  %v538 = vpop.f32.mrb[0].mxu0
  %539 = vmatprep.mubr.bf16.mxu0 0
  %540 = vmatmul.mubr.bf16.gmra.mrb[0].mxu0 %v337
  %v541 = vpop.f32.mrb[0].mxu0
  %v542 = vadd.f32 %v104, %v541
  %v543 = vpop.f32.mrb[0].mxu0
  %v544 = vpop.f32.mrb[0].mxu0
  %v545 = vadd.f32 %v104, %v544
  %v546 = vpop.f32.mrb[0].mxu0
  %547 = vmatprep.mubr.bf16.mxu0 0
  %548 = vmatmul.mubr.bf16.gmra.mrb[0].mxu0 %v340
  %v549 = vpop.f32.mrb[0].mxu0
  %v550 = vadd.f32 %v104, %v549
  %v551 = vpop.f32.mrb[0].mxu0
  %v552 = vpop.f32.mrb[0].mxu0
  %v553 = vadd.f32 %v104, %v552
  %v554 = vpop.f32.mrb[0].mxu0
  %555 = vmatprep.mubr.bf16.mxu0 0
  %556 = vmatmul.mubr.bf16.gmra.mrb[0].mxu0 %v343
  %v557 = vpop.f32.mrb[0].mxu0
  %v558 = vadd.f32 %v104, %v557
  %v559 = vpop.f32.mrb[0].mxu0
  %v560 = vpop.f32.mrb[0].mxu0
  %v561 = vadd.f32 %v104, %v560
  %v562 = vpop.f32.mrb[0].mxu0
  %563 = vmatprep.mubr.bf16.mxu0 0
  %564 = vmatmul.mubr.bf16.gmra.mrb[0].mxu0 %v346
  %v565 = vpop.f32.mrb[0].mxu0
  %v566 = vadd.f32 %v104, %v565
  %v567 = vpop.f32.mrb[0].mxu0
  %v568 = vpop.f32.mrb[0].mxu0
  %v569 = vadd.f32 %v104, %v568
  %v570 = vpop.f32.mrb[0].mxu0
  %571 = vmatprep.mubr.bf16.mxu0 0
  %572 = vmatmul.mubr.bf16.gmra.mrb[0].mxu0 %v349
  %v573 = vpop.f32.mrb[0].mxu0
  %v574 = vadd.f32 %v104, %v573
  %v575 = vpop.f32.mrb[0].mxu0
  %v576 = vpop.f32.mrb[0].mxu0
  %v577 = vadd.f32 %v104, %v576
  %v578 = vpop.f32.mrb[0].mxu0
  %579 = vmatprep.mubr.bf16.mxu0 0
  %580 = vmatmul.mubr.bf16.gmra.mrb[0].mxu0 %v352
  %v581 = vpop.f32.mrb[0].mxu0
  %v582 = vadd.f32 %v104, %v581
  %v583 = vpop.f32.mrb[0].mxu0
  %v584 = vpop.f32.mrb[0].mxu0
  %v585 = vadd.f32 %v104, %v584
  %v586 = vpop.f32.mrb[0].mxu0
  %587 = vmatprep.mubr.bf16.mxu0 0
  %588 = vmatmul.mubr.bf16.gmra.mrb[0].mxu0 %v355
  %v589 = vpop.f32.mrb[0].mxu0
  %v590 = vadd.f32 %v104, %v589
  %v591 = vpop.f32.mrb[0].mxu0
  %v592 = vpop.f32.mrb[0].mxu0
  %v593 = vadd.f32 %v104, %v592
  %v594 = vpop.f32.mrb[0].mxu0
  %595 = vmatprep.mubr.bf16.mxu0 0
  %596 = vmatmul.mubr.bf16.gmra.mrb[0].mxu0 %v358
  %v597 = vpop.f32.mrb[0].mxu0
  %v598 = vadd.f32 %v104, %v597
  %v599 = vpop.f32.mrb[0].mxu0
  %v600 = vpop.f32.mrb[0].mxu0
  %v601 = vadd.f32 %v104, %v600
  %v602 = vpop.f32.mrb[0].mxu0
  %603 = vmatprep.mubr.bf16.mxu0 0
  %604 = vmatmul.mubr.bf16.gmra.mrb[0].mxu0 %v361
  %v605 = vpop.f32.mrb[0].mxu0
  %v606 = vadd.f32 %v104, %v605
  %v607 = vpop.f32.mrb[0].mxu0
  %v608 = vpop.f32.mrb[0].mxu0
  %v609 = vadd.f32 %v104, %v608
  %v610 = vpop.f32.mrb[0].mxu0
  %611 = vmatprep.mubr.bf16.mxu0 0
  %612 = vmatmul.mubr.bf16.gmra.mrb[0].mxu0 %v364
  %v613 = vpop.f32.mrb[0].mxu0
  %v614 = vadd.f32 %v104, %v613
  %v615 = vpop.f32.mrb[0].mxu0
  %v616 = vpop.f32.mrb[0].mxu0
  %v617 = vadd.f32 %v104, %v616
  %v618 = vpop.f32.mrb[0].mxu0
  %619 = vmatprep.mubr.bf16.mxu0 0
  %620 = vmatmul.mubr.bf16.gmra.mrb[0].mxu0 %v367
  %v621 = vpop.f32.mrb[0].mxu0
  %v622 = vadd.f32 %v104, %v621
  %v623 = vpop.f32.mrb[0].mxu0
  %v624 = vpop.f32.mrb[0].mxu0
  %v625 = vadd.f32 %v104, %v624
  %v626 = vpop.f32.mrb[0].mxu0
  %627 = vmatprep.mubr.bf16.mxu0 0
  %628 = vmatmul.mubr.bf16.gmra.mrb[0].mxu0 %v370
  %v629 = vpop.f32.mrb[0].mxu0
  %v630 = vadd.f32 %v104, %v629
  %v631 = vpop.f32.mrb[0].mxu0
  %v632 = vpop.f32.mrb[0].mxu0
  %v633 = vadd.f32 %v104, %v632
  %v634 = vpop.f32.mrb[0].mxu0
  %635 = vmatprep.mubr.bf16.mxu0 0
  %636 = vmatmul.mubr.bf16.gmra.mrb[0].mxu0 %v373
  %v637 = vpop.f32.mrb[0].mxu0
  %v638 = vadd.f32 %v104, %v637
  %v639 = vpop.f32.mrb[0].mxu0
  %v640 = vpop.f32.mrb[0].mxu0
  %v641 = vadd.f32 %v104, %v640
  %v642 = vpop.f32.mrb[0].mxu0
  %643 = vmatprep.mubr.bf16.mxu0 0
  %644 = vmatmul.mubr.bf16.gmra.mrb[0].mxu0 %v376
  %v645 = vpop.f32.mrb[0].mxu0
  %v646 = vadd.f32 %v104, %v645
  %v647 = vpop.f32.mrb[0].mxu0
  %v648 = vpop.f32.mrb[0].mxu0
  %v649 = vadd.f32 %v104, %v648
  %v650 = vpop.f32.mrb[0].mxu0
  %651 = vmatprep.mubr.bf16.mxu0 0
  %652 = vmatmul.mubr.bf16.gmra.mrb[0].mxu0 %v379
  %v653 = vpop.f32.mrb[0].mxu0
  %v654 = vadd.f32 %v104, %v653
  %v655 = vpop.f32.mrb[0].mxu0
  %v656 = vpop.f32.mrb[0].mxu0
  %v657 = vadd.f32 %v104, %v656
  %v658 = vpop.f32.mrb[0].mxu0
  %659 = vmatprep.mubr.bf16.mxu0 0
  %660 = vmatmul.mubr.bf16.gmra.mrb[0].mxu0 %v382
  %v661 = vpop.f32.mrb[0].mxu0
  %v662 = vadd.f32 %v104, %v661
  %v663 = vpop.f32.mrb[0].mxu0
  %v664 = vpop.f32.mrb[0].mxu0
  %v665 = vadd.f32 %v104, %v664
  %v666 = vpop.f32.mrb[0].mxu0
  %667 = vmatprep.mubr.bf16.mxu0 0
  %668 = vmatmul.mubr.bf16.gmra.mrb[0].mxu0 %v385
  %v669 = vpop.f32.mrb[0].mxu0
  %v670 = vadd.f32 %v104, %v669
  %v671 = vpop.f32.mrb[0].mxu0
  %v672 = vpop.f32.mrb[0].mxu0
  %v673 = vadd.f32 %v104, %v672
  %v674 = vpop.f32.mrb[0].mxu0
  %675 = vdwg.mxu0
  %v676 = vmax.f32 %v422, 0.0
  %v677 = vmax.f32 %v425, 0.0
  %v678 = vmax.f32 %v430, 0.0
  %v679 = vmax.f32 %v433, 0.0
  %v680 = vmax.f32 %v438, 0.0
  %v681 = vmax.f32 %v441, 0.0
  %v682 = vmax.f32 %v446, 0.0
  %v683 = vmax.f32 %v449, 0.0
  %v684 = vmax.f32 %v454, 0.0
  %v685 = vmax.f32 %v457, 0.0
  %v686 = vmax.f32 %v462, 0.0
  %v687 = vmax.f32 %v465, 0.0
  %v688 = vmax.f32 %v470, 0.0
  %v689 = vmax.f32 %v473, 0.0
  %v690 = vmax.f32 %v478, 0.0
  %v691 = vmax.f32 %v481, 0.0
  %v692 = vmax.f32 %v486, 0.0
  %v693 = vmax.f32 %v489, 0.0
  %v694 = vmax.f32 %v494, 0.0
  %v695 = vmax.f32 %v497, 0.0
  %v696 = vmax.f32 %v502, 0.0
  %v697 = vmax.f32 %v505, 0.0
  %v698 = vmax.f32 %v510, 0.0
  %v699 = vmax.f32 %v513, 0.0
  %v700 = vmax.f32 %v518, 0.0
  %v701 = vmax.f32 %v521, 0.0
  %v702 = vmax.f32 %v526, 0.0
  %v703 = vmax.f32 %v529, 0.0
  %v704 = vmax.f32 %v534, 0.0
  %v705 = vmax.f32 %v537, 0.0
  %v706 = vmax.f32 %v542, 0.0
  %v707 = vmax.f32 %v545, 0.0
  %v708 = vmax.f32 %v550, 0.0
  %v709 = vmax.f32 %v553, 0.0
  %v710 = vmax.f32 %v558, 0.0
  %v711 = vmax.f32 %v561, 0.0
  %v712 = vmax.f32 %v566, 0.0
  %v713 = vmax.f32 %v569, 0.0
  %v714 = vmax.f32 %v574, 0.0
  %v715 = vmax.f32 %v577, 0.0
  %v716 = vmax.f32 %v582, 0.0
  %v717 = vmax.f32 %v585, 0.0
  %v718 = vmax.f32 %v590, 0.0
  %v719 = vmax.f32 %v593, 0.0
  %v720 = vmax.f32 %v598, 0.0
  %v721 = vmax.f32 %v601, 0.0
  %v722 = vmax.f32 %v606, 0.0
  %v723 = vmax.f32 %v609, 0.0
  %v724 = vmax.f32 %v614, 0.0
  %v725 = vmax.f32 %v617, 0.0
  %v726 = vmax.f32 %v622, 0.0
  %v727 = vmax.f32 %v625, 0.0
  %v728 = vmax.f32 %v630, 0.0
  %v729 = vmax.f32 %v633, 0.0
  %v730 = vmax.f32 %v638, 0.0
  %v731 = vmax.f32 %v641, 0.0
  %v732 = vmax.f32 %v646, 0.0
  %v733 = vmax.f32 %v649, 0.0
  %v734 = vmax.f32 %v654, 0.0
  %v735 = vmax.f32 %v657, 0.0
  %v736 = vmax.f32 %v662, 0.0
  %v737 = vmax.f32 %v665, 0.0
  %v738 = vmax.f32 %v670, 0.0
  %v739 = vmax.f32 %v673, 0.0
  %v740 = vpack.c.bf16 %v677, %v676
  %v741 = vpack.c.bf16 %v679, %v678
  %v742 = vpack.c.bf16 %v681, %v680
  %v743 = vpack.c.bf16 %v683, %v682
  %v744 = vpack.c.bf16 %v685, %v684
  %v745 = vpack.c.bf16 %v687, %v686
  %v746 = vpack.c.bf16 %v689, %v688
  %v747 = vpack.c.bf16 %v691, %v690
  %v748 = vpack.c.bf16 %v693, %v692
  %v749 = vpack.c.bf16 %v695, %v694
  %v750 = vpack.c.bf16 %v697, %v696
  %v751 = vpack.c.bf16 %v699, %v698
  %v752 = vpack.c.bf16 %v701, %v700
  %v753 = vpack.c.bf16 %v703, %v702
  %v754 = vpack.c.bf16 %v705, %v704
  %v755 = vpack.c.bf16 %v707, %v706
  %v756 = vpack.c.bf16 %v709, %v708
  %v757 = vpack.c.bf16 %v711, %v710
  %v758 = vpack.c.bf16 %v713, %v712
  %v759 = vpack.c.bf16 %v715, %v714
  %v760 = vpack.c.bf16 %v717, %v716
  %v761 = vpack.c.bf16 %v719, %v718
  %v762 = vpack.c.bf16 %v721, %v720
  %v763 = vpack.c.bf16 %v723, %v722
  %v764 = vpack.c.bf16 %v725, %v724
  %v765 = vpack.c.bf16 %v727, %v726
  %v766 = vpack.c.bf16 %v729, %v728
  %v767 = vpack.c.bf16 %v731, %v730
  %v768 = vpack.c.bf16 %v733, %v732
  %v769 = vpack.c.bf16 %v735, %v734
  %v770 = vpack.c.bf16 %v737, %v736
  %v771 = vpack.c.bf16 %v739, %v738
  %v772 = vld [vmem:[%s3] sm:$0xff]
  %v773 = vld [vmem:[%s3 + $0x8] sm:$0xff]
  %v774 = vld [vmem:[%s3 + $0x10] sm:$0xff]
  %v775 = vld [vmem:[%s3 + $0x18] sm:$0xff]
  %v776 = vld [vmem:[%s3 + $0x20] sm:$0xff]
  %v777 = vld [vmem:[%s3 + $0x28] sm:$0xff]
  %v778 = vld [vmem:[%s3 + $0x30] sm:$0xff]
  %v779 = vld [vmem:[%s3 + $0x38] sm:$0xff]
  %v780 = vld [vmem:[%s3 + $0x40] sm:$0xff]
  %v781 = vld [vmem:[%s3 + $0x48] sm:$0xff]
  %v782 = vld [vmem:[%s3 + $0x50] sm:$0xff]
  %v783 = vld [vmem:[%s3 + $0x58] sm:$0xff]
  %v784 = vld [vmem:[%s3 + $0x60] sm:$0xff]
  %v785 = vld [vmem:[%s3 + $0x68] sm:$0xff]
  %v786 = vld [vmem:[%s3 + $0x70] sm:$0xff]
  %v787 = vld [vmem:[%s3 + $0x78] sm:$0xff]
  %v788 = vld [vmem:[%s4] sm:$0x3]
  %v790 = vlaneseq
  %v791 = vshrl.u32 %v790, 7
  %v792 = vsub.s32 0, %v791
  %v793 = vrot.slane %v788, %v792
  %v794 = vlaneseq
  %v795 = vshrl.u32 %v794, 7
  %v796 = vsub.s32 1, %v795
  %v797 = vrot.slane %v788, %v796
  %v816 = vunpack.c.l.b16 %v772
  %v817 = vunpack.c.h.b16 %v772
  %v818 = vunpack.c.l.b16 %v773
  %v819 = vunpack.c.h.b16 %v773
  %v820 = vunpack.c.l.b16 %v774
  %v821 = vunpack.c.h.b16 %v774
  %v822 = vunpack.c.l.b16 %v775
  %v823 = vunpack.c.h.b16 %v775
  %v824 = vunpack.c.l.b16 %v776
  %v825 = vunpack.c.h.b16 %v776
  %v826 = vunpack.c.l.b16 %v777
  %v827 = vunpack.c.h.b16 %v777
  %v828 = vunpack.c.l.b16 %v778
  %v829 = vunpack.c.h.b16 %v778
  %v830 = vunpack.c.l.b16 %v779
  %v831 = vunpack.c.h.b16 %v779
  %v832 = vunpack.c.l.b16 %v780
  %v833 = vunpack.c.h.b16 %v780
  %v834 = vunpack.c.l.b16 %v781
  %v835 = vunpack.c.h.b16 %v781
  %v836 = vunpack.c.l.b16 %v782
  %v837 = vunpack.c.h.b16 %v782
  %v838 = vunpack.c.l.b16 %v783
  %v839 = vunpack.c.h.b16 %v783
  %v840 = vunpack.c.l.b16 %v784
  %v841 = vunpack.c.h.b16 %v784
  %v842 = vunpack.c.l.b16 %v785
  %v843 = vunpack.c.h.b16 %v785
  %v844 = vunpack.c.l.b16 %v786
  %v845 = vunpack.c.h.b16 %v786
  %v846 = vunpack.c.l.b16 %v787
  %v847 = vunpack.c.h.b16 %v787
  %v848 = vpack.c.b16 %v818, %v816
  %v849 = vpack.c.b16 %v819, %v817
  %v850 = vpack.c.b16 %v822, %v820
  %v851 = vpack.c.b16 %v823, %v821
  %v852 = vpack.c.b16 %v826, %v824
  %v853 = vpack.c.b16 %v827, %v825
  %v854 = vpack.c.b16 %v830, %v828
  %v855 = vpack.c.b16 %v831, %v829
  %v856 = vpack.c.b16 %v834, %v832
  %v857 = vpack.c.b16 %v835, %v833
  %v858 = vpack.c.b16 %v838, %v836
  %v859 = vpack.c.b16 %v839, %v837
  %v860 = vpack.c.b16 %v842, %v840
  %v861 = vpack.c.b16 %v843, %v841
  %v862 = vpack.c.b16 %v846, %v844
  %v863 = vpack.c.b16 %v847, %v845
  %880 = vmatprep.subr.bf16.mxu0 %v849
  %881 = vmatpush1.bf16.msra.mxu0 %v848
  %882 = vmatprep.subr.bf16.mxu0 %v851
  %883 = vmatpush1.bf16.msra.mxu0 %v850
  %884 = vmatprep.subr.bf16.mxu0 %v853
  %885 = vmatpush1.bf16.msra.mxu0 %v852
  %886 = vmatprep.subr.bf16.mxu0 %v855
  %887 = vmatpush1.bf16.msra.mxu0 %v854
  %888 = vmatprep.subr.bf16.mxu0 %v857
  %889 = vmatpush1.bf16.msra.mxu0 %v856
  %890 = vmatprep.subr.bf16.mxu0 %v859
  %891 = vmatpush1.bf16.msra.mxu0 %v858
  %892 = vmatprep.subr.bf16.mxu0 %v861
  %893 = vmatpush1.bf16.msra.mxu0 %v860
  %894 = vmatprep.subr.bf16.mxu0 %v863
  %895 = vmatpush1.bf16.msra.mxu0 %v862
  %896 = vmatprep.subr.bf16.mxu0 0
  %897 = vmatpush1.bf16.msra.mxu0 0
  %898 = vmatprep.subr.bf16.mxu0 0
  %899 = vmatpush1.bf16.msra.mxu0 0
  %900 = vmatprep.subr.bf16.mxu0 0
  %901 = vmatpush1.bf16.msra.mxu0 0
  %902 = vmatprep.subr.bf16.mxu0 0
  %903 = vmatpush1.bf16.msra.mxu0 0
  %904 = vmatprep.subr.bf16.mxu0 0
  %905 = vmatpush1.bf16.msra.mxu0 0
  %906 = vmatprep.subr.bf16.mxu0 0
  %907 = vmatpush1.bf16.msra.mxu0 0
  %908 = vmatprep.subr.bf16.mxu0 0
  %909 = vmatpush1.bf16.msra.mxu0 0
  %910 = vmatprep.subr.bf16.mxu0 0
  %911 = vmatpush1.bf16.msra.mxu0 0
  %912 = vmatprep.mubr.bf16.mxu0 0
  %913 = vmatmul.mubr.bf16.gmra.mrb[0].mxu0 %v740
  %v914 = vpop.f32.mrb[0].mxu0
  %v915 = vadd.f32 %v793, %v914
  %v916 = vpop.f32.mrb[0].mxu0
  %v917 = vadd.f32 %v797, %v916
  %v918 = vpop.f32.mrb[0].mxu0
  %v919 = vadd.f32 %v793, %v918
  %v920 = vpop.f32.mrb[0].mxu0
  %v921 = vadd.f32 %v797, %v920
  %922 = vmatprep.mubr.bf16.mxu0 0
  %923 = vmatmul.mubr.bf16.gmra.mrb[0].mxu0 %v741
  %v924 = vpop.f32.mrb[0].mxu0
  %v925 = vadd.f32 %v793, %v924
  %v926 = vpop.f32.mrb[0].mxu0
  %v927 = vadd.f32 %v797, %v926
  %v928 = vpop.f32.mrb[0].mxu0
  %v929 = vadd.f32 %v793, %v928
  %v930 = vpop.f32.mrb[0].mxu0
  %v931 = vadd.f32 %v797, %v930
  %932 = vmatprep.mubr.bf16.mxu0 0
  %933 = vmatmul.mubr.bf16.gmra.mrb[0].mxu0 %v742
  %v934 = vpop.f32.mrb[0].mxu0
  %v935 = vadd.f32 %v793, %v934
  %v936 = vpop.f32.mrb[0].mxu0
  %v937 = vadd.f32 %v797, %v936
  %v938 = vpop.f32.mrb[0].mxu0
  %v939 = vadd.f32 %v793, %v938
  %v940 = vpop.f32.mrb[0].mxu0
  %v941 = vadd.f32 %v797, %v940
  %942 = vmatprep.mubr.bf16.mxu0 0
  %943 = vmatmul.mubr.bf16.gmra.mrb[0].mxu0 %v743
  %v944 = vpop.f32.mrb[0].mxu0
  %v945 = vadd.f32 %v793, %v944
  %v946 = vpop.f32.mrb[0].mxu0
  %v947 = vadd.f32 %v797, %v946
  %v948 = vpop.f32.mrb[0].mxu0
  %v949 = vadd.f32 %v793, %v948
  %v950 = vpop.f32.mrb[0].mxu0
  %v951 = vadd.f32 %v797, %v950
  %952 = vmatprep.mubr.bf16.mxu0 0
  %953 = vmatmul.mubr.bf16.gmra.mrb[0].mxu0 %v744
  %v954 = vpop.f32.mrb[0].mxu0
  %v955 = vadd.f32 %v793, %v954
  %v956 = vpop.f32.mrb[0].mxu0
  %v957 = vadd.f32 %v797, %v956
  %v958 = vpop.f32.mrb[0].mxu0
  %v959 = vadd.f32 %v793, %v958
  %v960 = vpop.f32.mrb[0].mxu0
  %v961 = vadd.f32 %v797, %v960
  %962 = vmatprep.mubr.bf16.mxu0 0
  %963 = vmatmul.mubr.bf16.gmra.mrb[0].mxu0 %v745
  %v964 = vpop.f32.mrb[0].mxu0
  %v965 = vadd.f32 %v793, %v964
  %v966 = vpop.f32.mrb[0].mxu0
  %v967 = vadd.f32 %v797, %v966
  %v968 = vpop.f32.mrb[0].mxu0
  %v969 = vadd.f32 %v793, %v968
  %v970 = vpop.f32.mrb[0].mxu0
  %v971 = vadd.f32 %v797, %v970
  %972 = vmatprep.mubr.bf16.mxu0 0
  %973 = vmatmul.mubr.bf16.gmra.mrb[0].mxu0 %v746
  %v974 = vpop.f32.mrb[0].mxu0
  %v975 = vadd.f32 %v793, %v974
  %v976 = vpop.f32.mrb[0].mxu0
  %v977 = vadd.f32 %v797, %v976
  %v978 = vpop.f32.mrb[0].mxu0
  %v979 = vadd.f32 %v793, %v978
  %v980 = vpop.f32.mrb[0].mxu0
  %v981 = vadd.f32 %v797, %v980
  %982 = vmatprep.mubr.bf16.mxu0 0
  %983 = vmatmul.mubr.bf16.gmra.mrb[0].mxu0 %v747
  %v984 = vpop.f32.mrb[0].mxu0
  %v985 = vadd.f32 %v793, %v984
  %v986 = vpop.f32.mrb[0].mxu0
  %v987 = vadd.f32 %v797, %v986
  %v988 = vpop.f32.mrb[0].mxu0
  %v989 = vadd.f32 %v793, %v988
  %v990 = vpop.f32.mrb[0].mxu0
  %v991 = vadd.f32 %v797, %v990
  %992 = vmatprep.mubr.bf16.mxu0 0
  %993 = vmatmul.mubr.bf16.gmra.mrb[0].mxu0 %v748
  %v994 = vpop.f32.mrb[0].mxu0
  %v995 = vadd.f32 %v793, %v994
  %v996 = vpop.f32.mrb[0].mxu0
  %v997 = vadd.f32 %v797, %v996
  %v998 = vpop.f32.mrb[0].mxu0
  %v999 = vadd.f32 %v793, %v998
  %v1000 = vpop.f32.mrb[0].mxu0
  %v1001 = vadd.f32 %v797, %v1000
  %1002 = vmatprep.mubr.bf16.mxu0 0
  %1003 = vmatmul.mubr.bf16.gmra.mrb[0].mxu0 %v749
  %v1004 = vpop.f32.mrb[0].mxu0
  %v1005 = vadd.f32 %v793, %v1004
  %v1006 = vpop.f32.mrb[0].mxu0
  %v1007 = vadd.f32 %v797, %v1006
  %v1008 = vpop.f32.mrb[0].mxu0
  %v1009 = vadd.f32 %v793, %v1008
  %v1010 = vpop.f32.mrb[0].mxu0
  %v1011 = vadd.f32 %v797, %v1010
  %1012 = vmatprep.mubr.bf16.mxu0 0
  %1013 = vmatmul.mubr.bf16.gmra.mrb[0].mxu0 %v750
  %v1014 = vpop.f32.mrb[0].mxu0
  %v1015 = vadd.f32 %v793, %v1014
  %v1016 = vpop.f32.mrb[0].mxu0
  %v1017 = vadd.f32 %v797, %v1016
  %v1018 = vpop.f32.mrb[0].mxu0
  %v1019 = vadd.f32 %v793, %v1018
  %v1020 = vpop.f32.mrb[0].mxu0
  %v1021 = vadd.f32 %v797, %v1020
  %1022 = vmatprep.mubr.bf16.mxu0 0
  %1023 = vmatmul.mubr.bf16.gmra.mrb[0].mxu0 %v751
  %v1024 = vpop.f32.mrb[0].mxu0
  %v1025 = vadd.f32 %v793, %v1024
  %v1026 = vpop.f32.mrb[0].mxu0
  %v1027 = vadd.f32 %v797, %v1026
  %v1028 = vpop.f32.mrb[0].mxu0
  %v1029 = vadd.f32 %v793, %v1028
  %v1030 = vpop.f32.mrb[0].mxu0
  %v1031 = vadd.f32 %v797, %v1030
  %1032 = vmatprep.mubr.bf16.mxu0 0
  %1033 = vmatmul.mubr.bf16.gmra.mrb[0].mxu0 %v752
  %v1034 = vpop.f32.mrb[0].mxu0
  %v1035 = vadd.f32 %v793, %v1034
  %v1036 = vpop.f32.mrb[0].mxu0
  %v1037 = vadd.f32 %v797, %v1036
  %v1038 = vpop.f32.mrb[0].mxu0
  %v1039 = vadd.f32 %v793, %v1038
  %v1040 = vpop.f32.mrb[0].mxu0
  %v1041 = vadd.f32 %v797, %v1040
  %1042 = vmatprep.mubr.bf16.mxu0 0
  %1043 = vmatmul.mubr.bf16.gmra.mrb[0].mxu0 %v753
  %v1044 = vpop.f32.mrb[0].mxu0
  %v1045 = vadd.f32 %v793, %v1044
  %v1046 = vpop.f32.mrb[0].mxu0
  %v1047 = vadd.f32 %v797, %v1046
  %v1048 = vpop.f32.mrb[0].mxu0
  %v1049 = vadd.f32 %v793, %v1048
  %v1050 = vpop.f32.mrb[0].mxu0
  %v1051 = vadd.f32 %v797, %v1050
  %1052 = vmatprep.mubr.bf16.mxu0 0
  %1053 = vmatmul.mubr.bf16.gmra.mrb[0].mxu0 %v754
  %v1054 = vpop.f32.mrb[0].mxu0
  %v1055 = vadd.f32 %v793, %v1054
  %v1056 = vpop.f32.mrb[0].mxu0
  %v1057 = vadd.f32 %v797, %v1056
  %v1058 = vpop.f32.mrb[0].mxu0
  %v1059 = vadd.f32 %v793, %v1058
  %v1060 = vpop.f32.mrb[0].mxu0
  %v1061 = vadd.f32 %v797, %v1060
  %1062 = vmatprep.mubr.bf16.mxu0 0
  %1063 = vmatmul.mubr.bf16.gmra.mrb[0].mxu0 %v755
  %v1064 = vpop.f32.mrb[0].mxu0
  %v1065 = vadd.f32 %v793, %v1064
  %v1066 = vpop.f32.mrb[0].mxu0
  %v1067 = vadd.f32 %v797, %v1066
  %v1068 = vpop.f32.mrb[0].mxu0
  %v1069 = vadd.f32 %v793, %v1068
  %v1070 = vpop.f32.mrb[0].mxu0
  %v1071 = vadd.f32 %v797, %v1070
  %1072 = vmatprep.mubr.bf16.mxu0 0
  %1073 = vmatmul.mubr.bf16.gmra.mrb[0].mxu0 %v756
  %v1074 = vpop.f32.mrb[0].mxu0
  %v1075 = vadd.f32 %v793, %v1074
  %v1076 = vpop.f32.mrb[0].mxu0
  %v1077 = vadd.f32 %v797, %v1076
  %v1078 = vpop.f32.mrb[0].mxu0
  %v1079 = vadd.f32 %v793, %v1078
  %v1080 = vpop.f32.mrb[0].mxu0
  %v1081 = vadd.f32 %v797, %v1080
  %1082 = vmatprep.mubr.bf16.mxu0 0
  %1083 = vmatmul.mubr.bf16.gmra.mrb[0].mxu0 %v757
  %v1084 = vpop.f32.mrb[0].mxu0
  %v1085 = vadd.f32 %v793, %v1084
  %v1086 = vpop.f32.mrb[0].mxu0
  %v1087 = vadd.f32 %v797, %v1086
  %v1088 = vpop.f32.mrb[0].mxu0
  %v1089 = vadd.f32 %v793, %v1088
  %v1090 = vpop.f32.mrb[0].mxu0
  %v1091 = vadd.f32 %v797, %v1090
  %1092 = vmatprep.mubr.bf16.mxu0 0
  %1093 = vmatmul.mubr.bf16.gmra.mrb[0].mxu0 %v758
  %v1094 = vpop.f32.mrb[0].mxu0
  %v1095 = vadd.f32 %v793, %v1094
  %v1096 = vpop.f32.mrb[0].mxu0
  %v1097 = vadd.f32 %v797, %v1096
  %v1098 = vpop.f32.mrb[0].mxu0
  %v1099 = vadd.f32 %v793, %v1098
  %v1100 = vpop.f32.mrb[0].mxu0
  %v1101 = vadd.f32 %v797, %v1100
  %1102 = vmatprep.mubr.bf16.mxu0 0
  %1103 = vmatmul.mubr.bf16.gmra.mrb[0].mxu0 %v759
  %v1104 = vpop.f32.mrb[0].mxu0
  %v1105 = vadd.f32 %v793, %v1104
  %v1106 = vpop.f32.mrb[0].mxu0
  %v1107 = vadd.f32 %v797, %v1106
  %v1108 = vpop.f32.mrb[0].mxu0
  %v1109 = vadd.f32 %v793, %v1108
  %v1110 = vpop.f32.mrb[0].mxu0
  %v1111 = vadd.f32 %v797, %v1110
  %1112 = vmatprep.mubr.bf16.mxu0 0
  %1113 = vmatmul.mubr.bf16.gmra.mrb[0].mxu0 %v760
  %v1114 = vpop.f32.mrb[0].mxu0
  %v1115 = vadd.f32 %v793, %v1114
  %v1116 = vpop.f32.mrb[0].mxu0
  %v1117 = vadd.f32 %v797, %v1116
  %v1118 = vpop.f32.mrb[0].mxu0
  %v1119 = vadd.f32 %v793, %v1118
  %v1120 = vpop.f32.mrb[0].mxu0
  %v1121 = vadd.f32 %v797, %v1120
  %1122 = vmatprep.mubr.bf16.mxu0 0
  %1123 = vmatmul.mubr.bf16.gmra.mrb[0].mxu0 %v761
  %v1124 = vpop.f32.mrb[0].mxu0
  %v1125 = vadd.f32 %v793, %v1124
  %v1126 = vpop.f32.mrb[0].mxu0
  %v1127 = vadd.f32 %v797, %v1126
  %v1128 = vpop.f32.mrb[0].mxu0
  %v1129 = vadd.f32 %v793, %v1128
  %v1130 = vpop.f32.mrb[0].mxu0
  %v1131 = vadd.f32 %v797, %v1130
  %1132 = vmatprep.mubr.bf16.mxu0 0
  %1133 = vmatmul.mubr.bf16.gmra.mrb[0].mxu0 %v762
  %v1134 = vpop.f32.mrb[0].mxu0
  %v1135 = vadd.f32 %v793, %v1134
  %v1136 = vpop.f32.mrb[0].mxu0
  %v1137 = vadd.f32 %v797, %v1136
  %v1138 = vpop.f32.mrb[0].mxu0
  %v1139 = vadd.f32 %v793, %v1138
  %v1140 = vpop.f32.mrb[0].mxu0
  %v1141 = vadd.f32 %v797, %v1140
  %1142 = vmatprep.mubr.bf16.mxu0 0
  %1143 = vmatmul.mubr.bf16.gmra.mrb[0].mxu0 %v763
  %v1144 = vpop.f32.mrb[0].mxu0
  %v1145 = vadd.f32 %v793, %v1144
  %v1146 = vpop.f32.mrb[0].mxu0
  %v1147 = vadd.f32 %v797, %v1146
  %v1148 = vpop.f32.mrb[0].mxu0
  %v1149 = vadd.f32 %v793, %v1148
  %v1150 = vpop.f32.mrb[0].mxu0
  %v1151 = vadd.f32 %v797, %v1150
  %1152 = vmatprep.mubr.bf16.mxu0 0
  %1153 = vmatmul.mubr.bf16.gmra.mrb[0].mxu0 %v764
  %v1154 = vpop.f32.mrb[0].mxu0
  %v1155 = vadd.f32 %v793, %v1154
  %v1156 = vpop.f32.mrb[0].mxu0
  %v1157 = vadd.f32 %v797, %v1156
  %v1158 = vpop.f32.mrb[0].mxu0
  %v1159 = vadd.f32 %v793, %v1158
  %v1160 = vpop.f32.mrb[0].mxu0
  %v1161 = vadd.f32 %v797, %v1160
  %1162 = vmatprep.mubr.bf16.mxu0 0
  %1163 = vmatmul.mubr.bf16.gmra.mrb[0].mxu0 %v765
  %v1164 = vpop.f32.mrb[0].mxu0
  %v1165 = vadd.f32 %v793, %v1164
  %v1166 = vpop.f32.mrb[0].mxu0
  %v1167 = vadd.f32 %v797, %v1166
  %v1168 = vpop.f32.mrb[0].mxu0
  %v1169 = vadd.f32 %v793, %v1168
  %v1170 = vpop.f32.mrb[0].mxu0
  %v1171 = vadd.f32 %v797, %v1170
  %1172 = vmatprep.mubr.bf16.mxu0 0
  %1173 = vmatmul.mubr.bf16.gmra.mrb[0].mxu0 %v766
  %v1174 = vpop.f32.mrb[0].mxu0
  %v1175 = vadd.f32 %v793, %v1174
  %v1176 = vpop.f32.mrb[0].mxu0
  %v1177 = vadd.f32 %v797, %v1176
  %v1178 = vpop.f32.mrb[0].mxu0
  %v1179 = vadd.f32 %v793, %v1178
  %v1180 = vpop.f32.mrb[0].mxu0
  %v1181 = vadd.f32 %v797, %v1180
  %1182 = vmatprep.mubr.bf16.mxu0 0
  %1183 = vmatmul.mubr.bf16.gmra.mrb[0].mxu0 %v767
  %v1184 = vpop.f32.mrb[0].mxu0
  %v1185 = vadd.f32 %v793, %v1184
  %v1186 = vpop.f32.mrb[0].mxu0
  %v1187 = vadd.f32 %v797, %v1186
  %v1188 = vpop.f32.mrb[0].mxu0
  %v1189 = vadd.f32 %v793, %v1188
  %v1190 = vpop.f32.mrb[0].mxu0
  %v1191 = vadd.f32 %v797, %v1190
  %1192 = vmatprep.mubr.bf16.mxu0 0
  %1193 = vmatmul.mubr.bf16.gmra.mrb[0].mxu0 %v768
  %v1194 = vpop.f32.mrb[0].mxu0
  %v1195 = vadd.f32 %v793, %v1194
  %v1196 = vpop.f32.mrb[0].mxu0
  %v1197 = vadd.f32 %v797, %v1196
  %v1198 = vpop.f32.mrb[0].mxu0
  %v1199 = vadd.f32 %v793, %v1198
  %v1200 = vpop.f32.mrb[0].mxu0
  %v1201 = vadd.f32 %v797, %v1200
  %1202 = vmatprep.mubr.bf16.mxu0 0
  %1203 = vmatmul.mubr.bf16.gmra.mrb[0].mxu0 %v769
  %v1204 = vpop.f32.mrb[0].mxu0
  %v1205 = vadd.f32 %v793, %v1204
  %v1206 = vpop.f32.mrb[0].mxu0
  %v1207 = vadd.f32 %v797, %v1206
  %v1208 = vpop.f32.mrb[0].mxu0
  %v1209 = vadd.f32 %v793, %v1208
  %v1210 = vpop.f32.mrb[0].mxu0
  %v1211 = vadd.f32 %v797, %v1210
  %1212 = vmatprep.mubr.bf16.mxu0 0
  %1213 = vmatmul.mubr.bf16.gmra.mrb[0].mxu0 %v770
  %v1214 = vpop.f32.mrb[0].mxu0
  %v1215 = vadd.f32 %v793, %v1214
  %v1216 = vpop.f32.mrb[0].mxu0
  %v1217 = vadd.f32 %v797, %v1216
  %v1218 = vpop.f32.mrb[0].mxu0
  %v1219 = vadd.f32 %v793, %v1218
  %v1220 = vpop.f32.mrb[0].mxu0
  %v1221 = vadd.f32 %v797, %v1220
  %1222 = vmatprep.mubr.bf16.mxu0 0
  %1223 = vmatmul.mubr.bf16.gmra.mrb[0].mxu0 %v771
  %v1224 = vpop.f32.mrb[0].mxu0
  %v1225 = vadd.f32 %v793, %v1224
  %v1226 = vpop.f32.mrb[0].mxu0
  %v1227 = vadd.f32 %v797, %v1226
  %v1228 = vpop.f32.mrb[0].mxu0
  %v1229 = vadd.f32 %v793, %v1228
  %v1230 = vpop.f32.mrb[0].mxu0
  %v1231 = vadd.f32 %v797, %v1230
  %1232 = vdwg.mxu0
  %v1233 = vmax.f32 %v915, 0.0
  %v1234 = vmax.f32 %v917, 0.0
  %v1235 = vmax.f32 %v919, 0.0
  %v1236 = vmax.f32 %v921, 0.0
  %v1237 = vmax.f32 %v925, 0.0
  %v1238 = vmax.f32 %v927, 0.0
  %v1239 = vmax.f32 %v929, 0.0
  %v1240 = vmax.f32 %v931, 0.0
  %v1241 = vmax.f32 %v935, 0.0
  %v1242 = vmax.f32 %v937, 0.0
  %v1243 = vmax.f32 %v939, 0.0
  %v1244 = vmax.f32 %v941, 0.0
  %v1245 = vmax.f32 %v945, 0.0
  %v1246 = vmax.f32 %v947, 0.0
  %v1247 = vmax.f32 %v949, 0.0
  %v1248 = vmax.f32 %v951, 0.0
  %v1249 = vmax.f32 %v955, 0.0
  %v1250 = vmax.f32 %v957, 0.0
  %v1251 = vmax.f32 %v959, 0.0
  %v1252 = vmax.f32 %v961, 0.0
  %v1253 = vmax.f32 %v965, 0.0
  %v1254 = vmax.f32 %v967, 0.0
  %v1255 = vmax.f32 %v969, 0.0
  %v1256 = vmax.f32 %v971, 0.0
  %v1257 = vmax.f32 %v975, 0.0
  %v1258 = vmax.f32 %v977, 0.0
  %v1259 = vmax.f32 %v979, 0.0
  %v1260 = vmax.f32 %v981, 0.0
  %v1261 = vmax.f32 %v985, 0.0
  %v1262 = vmax.f32 %v987, 0.0
  %v1263 = vmax.f32 %v989, 0.0
  %v1264 = vmax.f32 %v991, 0.0
  %v1265 = vmax.f32 %v995, 0.0
  %v1266 = vmax.f32 %v997, 0.0
  %v1267 = vmax.f32 %v999, 0.0
  %v1268 = vmax.f32 %v1001, 0.0
  %v1269 = vmax.f32 %v1005, 0.0
  %v1270 = vmax.f32 %v1007, 0.0
  %v1271 = vmax.f32 %v1009, 0.0
  %v1272 = vmax.f32 %v1011, 0.0
  %v1273 = vmax.f32 %v1015, 0.0
  %v1274 = vmax.f32 %v1017, 0.0
  %v1275 = vmax.f32 %v1019, 0.0
  %v1276 = vmax.f32 %v1021, 0.0
  %v1277 = vmax.f32 %v1025, 0.0
  %v1278 = vmax.f32 %v1027, 0.0
  %v1279 = vmax.f32 %v1029, 0.0
  %v1280 = vmax.f32 %v1031, 0.0
  %v1281 = vmax.f32 %v1035, 0.0
  %v1282 = vmax.f32 %v1037, 0.0
  %v1283 = vmax.f32 %v1039, 0.0
  %v1284 = vmax.f32 %v1041, 0.0
  %v1285 = vmax.f32 %v1045, 0.0
  %v1286 = vmax.f32 %v1047, 0.0
  %v1287 = vmax.f32 %v1049, 0.0
  %v1288 = vmax.f32 %v1051, 0.0
  %v1289 = vmax.f32 %v1055, 0.0
  %v1290 = vmax.f32 %v1057, 0.0
  %v1291 = vmax.f32 %v1059, 0.0
  %v1292 = vmax.f32 %v1061, 0.0
  %v1293 = vmax.f32 %v1065, 0.0
  %v1294 = vmax.f32 %v1067, 0.0
  %v1295 = vmax.f32 %v1069, 0.0
  %v1296 = vmax.f32 %v1071, 0.0
  %v1297 = vmax.f32 %v1075, 0.0
  %v1298 = vmax.f32 %v1077, 0.0
  %v1299 = vmax.f32 %v1079, 0.0
  %v1300 = vmax.f32 %v1081, 0.0
  %v1301 = vmax.f32 %v1085, 0.0
  %v1302 = vmax.f32 %v1087, 0.0
  %v1303 = vmax.f32 %v1089, 0.0
  %v1304 = vmax.f32 %v1091, 0.0
  %v1305 = vmax.f32 %v1095, 0.0
  %v1306 = vmax.f32 %v1097, 0.0
  %v1307 = vmax.f32 %v1099, 0.0
  %v1308 = vmax.f32 %v1101, 0.0
  %v1309 = vmax.f32 %v1105, 0.0
  %v1310 = vmax.f32 %v1107, 0.0
  %v1311 = vmax.f32 %v1109, 0.0
  %v1312 = vmax.f32 %v1111, 0.0
  %v1313 = vmax.f32 %v1115, 0.0
  %v1314 = vmax.f32 %v1117, 0.0
  %v1315 = vmax.f32 %v1119, 0.0
  %v1316 = vmax.f32 %v1121, 0.0
  %v1317 = vmax.f32 %v1125, 0.0
  %v1318 = vmax.f32 %v1127, 0.0
  %v1319 = vmax.f32 %v1129, 0.0
  %v1320 = vmax.f32 %v1131, 0.0
  %v1321 = vmax.f32 %v1135, 0.0
  %v1322 = vmax.f32 %v1137, 0.0
  %v1323 = vmax.f32 %v1139, 0.0
  %v1324 = vmax.f32 %v1141, 0.0
  %v1325 = vmax.f32 %v1145, 0.0
  %v1326 = vmax.f32 %v1147, 0.0
  %v1327 = vmax.f32 %v1149, 0.0
  %v1328 = vmax.f32 %v1151, 0.0
  %v1329 = vmax.f32 %v1155, 0.0
  %v1330 = vmax.f32 %v1157, 0.0
  %v1331 = vmax.f32 %v1159, 0.0
  %v1332 = vmax.f32 %v1161, 0.0
  %v1333 = vmax.f32 %v1165, 0.0
  %v1334 = vmax.f32 %v1167, 0.0
  %v1335 = vmax.f32 %v1169, 0.0
  %v1336 = vmax.f32 %v1171, 0.0
  %v1337 = vmax.f32 %v1175, 0.0
  %v1338 = vmax.f32 %v1177, 0.0
  %v1339 = vmax.f32 %v1179, 0.0
  %v1340 = vmax.f32 %v1181, 0.0
  %v1341 = vmax.f32 %v1185, 0.0
  %v1342 = vmax.f32 %v1187, 0.0
  %v1343 = vmax.f32 %v1189, 0.0
  %v1344 = vmax.f32 %v1191, 0.0
  %v1345 = vmax.f32 %v1195, 0.0
  %v1346 = vmax.f32 %v1197, 0.0
  %v1347 = vmax.f32 %v1199, 0.0
  %v1348 = vmax.f32 %v1201, 0.0
  %v1349 = vmax.f32 %v1205, 0.0
  %v1350 = vmax.f32 %v1207, 0.0
  %v1351 = vmax.f32 %v1209, 0.0
  %v1352 = vmax.f32 %v1211, 0.0
  %v1353 = vmax.f32 %v1215, 0.0
  %v1354 = vmax.f32 %v1217, 0.0
  %v1355 = vmax.f32 %v1219, 0.0
  %v1356 = vmax.f32 %v1221, 0.0
  %v1357 = vmax.f32 %v1225, 0.0
  %v1358 = vmax.f32 %v1227, 0.0
  %v1359 = vmax.f32 %v1229, 0.0
  %v1360 = vmax.f32 %v1231, 0.0
  %v1361 = vpack.c.bf16 %v1235, %v1233
  %v1362 = vpack.c.bf16 %v1236, %v1234
  %v1363 = vpack.c.bf16 %v1239, %v1237
  %v1364 = vpack.c.bf16 %v1240, %v1238
  %v1365 = vpack.c.bf16 %v1243, %v1241
  %v1366 = vpack.c.bf16 %v1244, %v1242
  %v1367 = vpack.c.bf16 %v1247, %v1245
  %v1368 = vpack.c.bf16 %v1248, %v1246
  %v1369 = vpack.c.bf16 %v1251, %v1249
  %v1370 = vpack.c.bf16 %v1252, %v1250
  %v1371 = vpack.c.bf16 %v1255, %v1253
  %v1372 = vpack.c.bf16 %v1256, %v1254
  %v1373 = vpack.c.bf16 %v1259, %v1257
  %v1374 = vpack.c.bf16 %v1260, %v1258
  %v1375 = vpack.c.bf16 %v1263, %v1261
  %v1376 = vpack.c.bf16 %v1264, %v1262
  %v1377 = vpack.c.bf16 %v1267, %v1265
  %v1378 = vpack.c.bf16 %v1268, %v1266
  %v1379 = vpack.c.bf16 %v1271, %v1269
  %v1380 = vpack.c.bf16 %v1272, %v1270
  %v1381 = vpack.c.bf16 %v1275, %v1273
  %v1382 = vpack.c.bf16 %v1276, %v1274
  %v1383 = vpack.c.bf16 %v1279, %v1277
  %v1384 = vpack.c.bf16 %v1280, %v1278
  %v1385 = vpack.c.bf16 %v1283, %v1281
  %v1386 = vpack.c.bf16 %v1284, %v1282
  %v1387 = vpack.c.bf16 %v1287, %v1285
  %v1388 = vpack.c.bf16 %v1288, %v1286
  %v1389 = vpack.c.bf16 %v1291, %v1289
  %v1390 = vpack.c.bf16 %v1292, %v1290
  %v1391 = vpack.c.bf16 %v1295, %v1293
  %v1392 = vpack.c.bf16 %v1296, %v1294
  %v1393 = vpack.c.bf16 %v1299, %v1297
  %v1394 = vpack.c.bf16 %v1300, %v1298
  %v1395 = vpack.c.bf16 %v1303, %v1301
  %v1396 = vpack.c.bf16 %v1304, %v1302
  %v1397 = vpack.c.bf16 %v1307, %v1305
  %v1398 = vpack.c.bf16 %v1308, %v1306
  %v1399 = vpack.c.bf16 %v1311, %v1309
  %v1400 = vpack.c.bf16 %v1312, %v1310
  %v1401 = vpack.c.bf16 %v1315, %v1313
  %v1402 = vpack.c.bf16 %v1316, %v1314
  %v1403 = vpack.c.bf16 %v1319, %v1317
  %v1404 = vpack.c.bf16 %v1320, %v1318
  %v1405 = vpack.c.bf16 %v1323, %v1321
  %v1406 = vpack.c.bf16 %v1324, %v1322
  %v1407 = vpack.c.bf16 %v1327, %v1325
  %v1408 = vpack.c.bf16 %v1328, %v1326
  %v1409 = vpack.c.bf16 %v1331, %v1329
  %v1410 = vpack.c.bf16 %v1332, %v1330
  %v1411 = vpack.c.bf16 %v1335, %v1333
  %v1412 = vpack.c.bf16 %v1336, %v1334
  %v1413 = vpack.c.bf16 %v1339, %v1337
  %v1414 = vpack.c.bf16 %v1340, %v1338
  %v1415 = vpack.c.bf16 %v1343, %v1341
  %v1416 = vpack.c.bf16 %v1344, %v1342
  %v1417 = vpack.c.bf16 %v1347, %v1345
  %v1418 = vpack.c.bf16 %v1348, %v1346
  %v1419 = vpack.c.bf16 %v1351, %v1349
  %v1420 = vpack.c.bf16 %v1352, %v1350
  %v1421 = vpack.c.bf16 %v1355, %v1353
  %v1422 = vpack.c.bf16 %v1356, %v1354
  %v1423 = vpack.c.bf16 %v1359, %v1357
  %v1424 = vpack.c.bf16 %v1360, %v1358
  %v1425 = vld [vmem:[%s5] sm:$0xff]
  %v1426 = vld [vmem:[%s5 + $0x8] sm:$0xff]
  %v1427 = vld [vmem:[%s5 + $0x10] sm:$0xff]
  %v1428 = vld [vmem:[%s5 + $0x18] sm:$0xff]
  %v1429 = vld [vmem:[%s5 + $0x20] sm:$0xff]
  %v1430 = vld [vmem:[%s5 + $0x28] sm:$0xff]
  %v1431 = vld [vmem:[%s5 + $0x30] sm:$0xff]
  %v1432 = vld [vmem:[%s5 + $0x38] sm:$0xff]
  %v1433 = vld [vmem:[%s5 + $0x40] sm:$0xff]
  %v1434 = vld [vmem:[%s5 + $0x48] sm:$0xff]
  %v1435 = vld [vmem:[%s5 + $0x50] sm:$0xff]
  %v1436 = vld [vmem:[%s5 + $0x58] sm:$0xff]
  %v1437 = vld [vmem:[%s5 + $0x60] sm:$0xff]
  %v1438 = vld [vmem:[%s5 + $0x68] sm:$0xff]
  %v1439 = vld [vmem:[%s5 + $0x70] sm:$0xff]
  %v1440 = vld [vmem:[%s5 + $0x78] sm:$0xff]
  %v1441 = vld [vmem:[%s5 + $0x80] sm:$0xff]
  %v1442 = vld [vmem:[%s5 + $0x88] sm:$0xff]
  %v1443 = vld [vmem:[%s5 + $0x90] sm:$0xff]
  %v1444 = vld [vmem:[%s5 + $0x98] sm:$0xff]
  %v1445 = vld [vmem:[%s5 + $0xa0] sm:$0xff]
  %v1446 = vld [vmem:[%s5 + $0xa8] sm:$0xff]
  %v1447 = vld [vmem:[%s5 + $0xb0] sm:$0xff]
  %v1448 = vld [vmem:[%s5 + $0xb8] sm:$0xff]
  %v1449 = vld [vmem:[%s5 + $0xc0] sm:$0xff]
  %v1450 = vld [vmem:[%s5 + $0xc8] sm:$0xff]
  %v1451 = vld [vmem:[%s5 + $0xd0] sm:$0xff]
  %v1452 = vld [vmem:[%s5 + $0xd8] sm:$0xff]
  %v1453 = vld [vmem:[%s5 + $0xe0] sm:$0xff]
  %v1454 = vld [vmem:[%s5 + $0xe8] sm:$0xff]
  %v1455 = vld [vmem:[%s5 + $0xf0] sm:$0xff]
  %v1456 = vld [vmem:[%s5 + $0xf8] sm:$0xff]
  %v1457 = vld [vmem:[%s6] sm:$0x3]
  %v1459 = vlaneseq
  %v1460 = vshrl.u32 %v1459, 7
  %v1461 = vsub.s32 0, %v1460
  %v1462 = vrot.slane %v1457, %v1461
  %v1463 = vlaneseq
  %v1464 = vshrl.u32 %v1463, 7
  %v1465 = vsub.s32 1, %v1464
  %v1466 = vrot.slane %v1457, %v1465
  %v1501 = vunpack.c.l.b16 %v1425
  %v1502 = vunpack.c.h.b16 %v1425
  %v1503 = vunpack.c.l.b16 %v1426
  %v1504 = vunpack.c.h.b16 %v1426
  %v1505 = vunpack.c.l.b16 %v1427
  %v1506 = vunpack.c.h.b16 %v1427
  %v1507 = vunpack.c.l.b16 %v1428
  %v1508 = vunpack.c.h.b16 %v1428
  %v1509 = vunpack.c.l.b16 %v1429
  %v1510 = vunpack.c.h.b16 %v1429
  %v1511 = vunpack.c.l.b16 %v1430
  %v1512 = vunpack.c.h.b16 %v1430
  %v1513 = vunpack.c.l.b16 %v1431
  %v1514 = vunpack.c.h.b16 %v1431
  %v1515 = vunpack.c.l.b16 %v1432
  %v1516 = vunpack.c.h.b16 %v1432
  %v1517 = vunpack.c.l.b16 %v1433
  %v1518 = vunpack.c.h.b16 %v1433
  %v1519 = vunpack.c.l.b16 %v1434
  %v1520 = vunpack.c.h.b16 %v1434
  %v1521 = vunpack.c.l.b16 %v1435
  %v1522 = vunpack.c.h.b16 %v1435
  %v1523 = vunpack.c.l.b16 %v1436
  %v1524 = vunpack.c.h.b16 %v1436
  %v1525 = vunpack.c.l.b16 %v1437
  %v1526 = vunpack.c.h.b16 %v1437
  %v1527 = vunpack.c.l.b16 %v1438
  %v1528 = vunpack.c.h.b16 %v1438
  %v1529 = vunpack.c.l.b16 %v1439
  %v1530 = vunpack.c.h.b16 %v1439
  %v1531 = vunpack.c.l.b16 %v1440
  %v1532 = vunpack.c.h.b16 %v1440
  %v1533 = vunpack.c.l.b16 %v1441
  %v1534 = vunpack.c.h.b16 %v1441
  %v1535 = vunpack.c.l.b16 %v1442
  %v1536 = vunpack.c.h.b16 %v1442
  %v1537 = vunpack.c.l.b16 %v1443
  %v1538 = vunpack.c.h.b16 %v1443
  %v1539 = vunpack.c.l.b16 %v1444
  %v1540 = vunpack.c.h.b16 %v1444
  %v1541 = vunpack.c.l.b16 %v1445
  %v1542 = vunpack.c.h.b16 %v1445
  %v1543 = vunpack.c.l.b16 %v1446
  %v1544 = vunpack.c.h.b16 %v1446
  %v1545 = vunpack.c.l.b16 %v1447
  %v1546 = vunpack.c.h.b16 %v1447
  %v1547 = vunpack.c.l.b16 %v1448
  %v1548 = vunpack.c.h.b16 %v1448
  %v1549 = vunpack.c.l.b16 %v1449
  %v1550 = vunpack.c.h.b16 %v1449
  %v1551 = vunpack.c.l.b16 %v1450
  %v1552 = vunpack.c.h.b16 %v1450
  %v1553 = vunpack.c.l.b16 %v1451
  %v1554 = vunpack.c.h.b16 %v1451
  %v1555 = vunpack.c.l.b16 %v1452
  %v1556 = vunpack.c.h.b16 %v1452
  %v1557 = vunpack.c.l.b16 %v1453
  %v1558 = vunpack.c.h.b16 %v1453
  %v1559 = vunpack.c.l.b16 %v1454
  %v1560 = vunpack.c.h.b16 %v1454
  %v1561 = vunpack.c.l.b16 %v1455
  %v1562 = vunpack.c.h.b16 %v1455
  %v1563 = vunpack.c.l.b16 %v1456
  %v1564 = vunpack.c.h.b16 %v1456
  %v1565 = vpack.c.b16 %v1503, %v1501
  %v1566 = vpack.c.b16 %v1504, %v1502
  %v1567 = vpack.c.b16 %v1507, %v1505
  %v1568 = vpack.c.b16 %v1508, %v1506
  %v1569 = vpack.c.b16 %v1511, %v1509
  %v1570 = vpack.c.b16 %v1512, %v1510
  %v1571 = vpack.c.b16 %v1515, %v1513
  %v1572 = vpack.c.b16 %v1516, %v1514
  %v1573 = vpack.c.b16 %v1519, %v1517
  %v1574 = vpack.c.b16 %v1520, %v1518
  %v1575 = vpack.c.b16 %v1523, %v1521
  %v1576 = vpack.c.b16 %v1524, %v1522
  %v1577 = vpack.c.b16 %v1527, %v1525
  %v1578 = vpack.c.b16 %v1528, %v1526
  %v1579 = vpack.c.b16 %v1531, %v1529
  %v1580 = vpack.c.b16 %v1532, %v1530
  %v1581 = vpack.c.b16 %v1535, %v1533
  %v1582 = vpack.c.b16 %v1536, %v1534
  %v1583 = vpack.c.b16 %v1539, %v1537
  %v1584 = vpack.c.b16 %v1540, %v1538
  %v1585 = vpack.c.b16 %v1543, %v1541
  %v1586 = vpack.c.b16 %v1544, %v1542
  %v1587 = vpack.c.b16 %v1547, %v1545
  %v1588 = vpack.c.b16 %v1548, %v1546
  %v1589 = vpack.c.b16 %v1551, %v1549
  %v1590 = vpack.c.b16 %v1552, %v1550
  %v1591 = vpack.c.b16 %v1555, %v1553
  %v1592 = vpack.c.b16 %v1556, %v1554
  %v1593 = vpack.c.b16 %v1559, %v1557
  %v1594 = vpack.c.b16 %v1560, %v1558
  %v1595 = vpack.c.b16 %v1563, %v1561
  %v1596 = vpack.c.b16 %v1564, %v1562
  %1629 = vmatprep.subr.bf16.mxu0 %v1566
  %1630 = vmatpush1.bf16.msra.mxu0 %v1565
  %1631 = vmatprep.subr.bf16.mxu0 %v1568
  %1632 = vmatpush1.bf16.msra.mxu0 %v1567
  %1633 = vmatprep.subr.bf16.mxu0 %v1570
  %1634 = vmatpush1.bf16.msra.mxu0 %v1569
  %1635 = vmatprep.subr.bf16.mxu0 %v1572
  %1636 = vmatpush1.bf16.msra.mxu0 %v1571
  %1637 = vmatprep.subr.bf16.mxu0 %v1574
  %1638 = vmatpush1.bf16.msra.mxu0 %v1573
  %1639 = vmatprep.subr.bf16.mxu0 %v1576
  %1640 = vmatpush1.bf16.msra.mxu0 %v1575
  %1641 = vmatprep.subr.bf16.mxu0 %v1578
  %1642 = vmatpush1.bf16.msra.mxu0 %v1577
  %1643 = vmatprep.subr.bf16.mxu0 %v1580
  %1644 = vmatpush1.bf16.msra.mxu0 %v1579
  %1645 = vmatprep.subr.bf16.mxu0 %v1582
  %1646 = vmatpush1.bf16.msra.mxu0 %v1581
  %1647 = vmatprep.subr.bf16.mxu0 %v1584
  %1648 = vmatpush1.bf16.msra.mxu0 %v1583
  %1649 = vmatprep.subr.bf16.mxu0 %v1586
  %1650 = vmatpush1.bf16.msra.mxu0 %v1585
  %1651 = vmatprep.subr.bf16.mxu0 %v1588
  %1652 = vmatpush1.bf16.msra.mxu0 %v1587
  %1653 = vmatprep.subr.bf16.mxu0 %v1590
  %1654 = vmatpush1.bf16.msra.mxu0 %v1589
  %1655 = vmatprep.subr.bf16.mxu0 %v1592
  %1656 = vmatpush1.bf16.msra.mxu0 %v1591
  %1657 = vmatprep.subr.bf16.mxu0 %v1594
  %1658 = vmatpush1.bf16.msra.mxu0 %v1593
  %1659 = vmatprep.subr.bf16.mxu0 %v1596
  %1660 = vmatpush1.bf16.msra.mxu0 %v1595
  %1661 = vmatprep.mubr.bf16.mxu0 %v1362
  %1662 = vmatmul.mubr.bf16.gmra.mrb[0].mxu0 %v1361
  %v1663 = vpop.f32.mrb[0].mxu0
  %v1664 = vadd.f32 %v1462, %v1663
  %v1665 = vpop.f32.mrb[0].mxu0
  %v1666 = vadd.f32 %v1466, %v1665
  %v1667 = vpop.f32.mrb[0].mxu0
  %v1668 = vadd.f32 %v1462, %v1667
  %v1669 = vpop.f32.mrb[0].mxu0
  %v1670 = vadd.f32 %v1466, %v1669
  %1671 = vmatprep.mubr.bf16.mxu0 %v1364
  %1672 = vmatmul.mubr.bf16.gmra.mrb[0].mxu0 %v1363
  %v1673 = vpop.f32.mrb[0].mxu0
  %v1674 = vadd.f32 %v1462, %v1673
  %v1675 = vpop.f32.mrb[0].mxu0
  %v1676 = vadd.f32 %v1466, %v1675
  %v1677 = vpop.f32.mrb[0].mxu0
  %v1678 = vadd.f32 %v1462, %v1677
  %v1679 = vpop.f32.mrb[0].mxu0
  %v1680 = vadd.f32 %v1466, %v1679
  %1681 = vmatprep.mubr.bf16.mxu0 %v1366
  %1682 = vmatmul.mubr.bf16.gmra.mrb[0].mxu0 %v1365
  %v1683 = vpop.f32.mrb[0].mxu0
  %v1684 = vadd.f32 %v1462, %v1683
  %v1685 = vpop.f32.mrb[0].mxu0
  %v1686 = vadd.f32 %v1466, %v1685
  %v1687 = vpop.f32.mrb[0].mxu0
  %v1688 = vadd.f32 %v1462, %v1687
  %v1689 = vpop.f32.mrb[0].mxu0
  %v1690 = vadd.f32 %v1466, %v1689
  %1691 = vmatprep.mubr.bf16.mxu0 %v1368
  %1692 = vmatmul.mubr.bf16.gmra.mrb[0].mxu0 %v1367
  %v1693 = vpop.f32.mrb[0].mxu0
  %v1694 = vadd.f32 %v1462, %v1693
  %v1695 = vpop.f32.mrb[0].mxu0
  %v1696 = vadd.f32 %v1466, %v1695
  %v1697 = vpop.f32.mrb[0].mxu0
  %v1698 = vadd.f32 %v1462, %v1697
  %v1699 = vpop.f32.mrb[0].mxu0
  %v1700 = vadd.f32 %v1466, %v1699
  %1701 = vmatprep.mubr.bf16.mxu0 %v1370
  %1702 = vmatmul.mubr.bf16.gmra.mrb[0].mxu0 %v1369
  %v1703 = vpop.f32.mrb[0].mxu0
  %v1704 = vadd.f32 %v1462, %v1703
  %v1705 = vpop.f32.mrb[0].mxu0
  %v1706 = vadd.f32 %v1466, %v1705
  %v1707 = vpop.f32.mrb[0].mxu0
  %v1708 = vadd.f32 %v1462, %v1707
  %v1709 = vpop.f32.mrb[0].mxu0
  %v1710 = vadd.f32 %v1466, %v1709
  %1711 = vmatprep.mubr.bf16.mxu0 %v1372
  %1712 = vmatmul.mubr.bf16.gmra.mrb[0].mxu0 %v1371
  %v1713 = vpop.f32.mrb[0].mxu0
  %v1714 = vadd.f32 %v1462, %v1713
  %v1715 = vpop.f32.mrb[0].mxu0
  %v1716 = vadd.f32 %v1466, %v1715
  %v1717 = vpop.f32.mrb[0].mxu0
  %v1718 = vadd.f32 %v1462, %v1717
  %v1719 = vpop.f32.mrb[0].mxu0
  %v1720 = vadd.f32 %v1466, %v1719
  %1721 = vmatprep.mubr.bf16.mxu0 %v1374
  %1722 = vmatmul.mubr.bf16.gmra.mrb[0].mxu0 %v1373
  %v1723 = vpop.f32.mrb[0].mxu0
  %v1724 = vadd.f32 %v1462, %v1723
  %v1725 = vpop.f32.mrb[0].mxu0
  %v1726 = vadd.f32 %v1466, %v1725
  %v1727 = vpop.f32.mrb[0].mxu0
  %v1728 = vadd.f32 %v1462, %v1727
  %v1729 = vpop.f32.mrb[0].mxu0
  %v1730 = vadd.f32 %v1466, %v1729
  %1731 = vmatprep.mubr.bf16.mxu0 %v1376
  %1732 = vmatmul.mubr.bf16.gmra.mrb[0].mxu0 %v1375
  %v1733 = vpop.f32.mrb[0].mxu0
  %v1734 = vadd.f32 %v1462, %v1733
  %v1735 = vpop.f32.mrb[0].mxu0
  %v1736 = vadd.f32 %v1466, %v1735
  %v1737 = vpop.f32.mrb[0].mxu0
  %v1738 = vadd.f32 %v1462, %v1737
  %v1739 = vpop.f32.mrb[0].mxu0
  %v1740 = vadd.f32 %v1466, %v1739
  %1741 = vmatprep.mubr.bf16.mxu0 %v1378
  %1742 = vmatmul.mubr.bf16.gmra.mrb[0].mxu0 %v1377
  %v1743 = vpop.f32.mrb[0].mxu0
  %v1744 = vadd.f32 %v1462, %v1743
  %v1745 = vpop.f32.mrb[0].mxu0
  %v1746 = vadd.f32 %v1466, %v1745
  %v1747 = vpop.f32.mrb[0].mxu0
  %v1748 = vadd.f32 %v1462, %v1747
  %v1749 = vpop.f32.mrb[0].mxu0
  %v1750 = vadd.f32 %v1466, %v1749
  %1751 = vmatprep.mubr.bf16.mxu0 %v1380
  %1752 = vmatmul.mubr.bf16.gmra.mrb[0].mxu0 %v1379
  %v1753 = vpop.f32.mrb[0].mxu0
  %v1754 = vadd.f32 %v1462, %v1753
  %v1755 = vpop.f32.mrb[0].mxu0
  %v1756 = vadd.f32 %v1466, %v1755
  %v1757 = vpop.f32.mrb[0].mxu0
  %v1758 = vadd.f32 %v1462, %v1757
  %v1759 = vpop.f32.mrb[0].mxu0
  %v1760 = vadd.f32 %v1466, %v1759
  %1761 = vmatprep.mubr.bf16.mxu0 %v1382
  %1762 = vmatmul.mubr.bf16.gmra.mrb[0].mxu0 %v1381
  %v1763 = vpop.f32.mrb[0].mxu0
  %v1764 = vadd.f32 %v1462, %v1763
  %v1765 = vpop.f32.mrb[0].mxu0
  %v1766 = vadd.f32 %v1466, %v1765
  %v1767 = vpop.f32.mrb[0].mxu0
  %v1768 = vadd.f32 %v1462, %v1767
  %v1769 = vpop.f32.mrb[0].mxu0
  %v1770 = vadd.f32 %v1466, %v1769
  %1771 = vmatprep.mubr.bf16.mxu0 %v1384
  %1772 = vmatmul.mubr.bf16.gmra.mrb[0].mxu0 %v1383
  %v1773 = vpop.f32.mrb[0].mxu0
  %v1774 = vadd.f32 %v1462, %v1773
  %v1775 = vpop.f32.mrb[0].mxu0
  %v1776 = vadd.f32 %v1466, %v1775
  %v1777 = vpop.f32.mrb[0].mxu0
  %v1778 = vadd.f32 %v1462, %v1777
  %v1779 = vpop.f32.mrb[0].mxu0
  %v1780 = vadd.f32 %v1466, %v1779
  %1781 = vmatprep.mubr.bf16.mxu0 %v1386
  %1782 = vmatmul.mubr.bf16.gmra.mrb[0].mxu0 %v1385
  %v1783 = vpop.f32.mrb[0].mxu0
  %v1784 = vadd.f32 %v1462, %v1783
  %v1785 = vpop.f32.mrb[0].mxu0
  %v1786 = vadd.f32 %v1466, %v1785
  %v1787 = vpop.f32.mrb[0].mxu0
  %v1788 = vadd.f32 %v1462, %v1787
  %v1789 = vpop.f32.mrb[0].mxu0
  %v1790 = vadd.f32 %v1466, %v1789
  %1791 = vmatprep.mubr.bf16.mxu0 %v1388
  %1792 = vmatmul.mubr.bf16.gmra.mrb[0].mxu0 %v1387
  %v1793 = vpop.f32.mrb[0].mxu0
  %v1794 = vadd.f32 %v1462, %v1793
  %v1795 = vpop.f32.mrb[0].mxu0
  %v1796 = vadd.f32 %v1466, %v1795
  %v1797 = vpop.f32.mrb[0].mxu0
  %v1798 = vadd.f32 %v1462, %v1797
  %v1799 = vpop.f32.mrb[0].mxu0
  %v1800 = vadd.f32 %v1466, %v1799
  %1801 = vmatprep.mubr.bf16.mxu0 %v1390
  %1802 = vmatmul.mubr.bf16.gmra.mrb[0].mxu0 %v1389
  %v1803 = vpop.f32.mrb[0].mxu0
  %v1804 = vadd.f32 %v1462, %v1803
  %v1805 = vpop.f32.mrb[0].mxu0
  %v1806 = vadd.f32 %v1466, %v1805
  %v1807 = vpop.f32.mrb[0].mxu0
  %v1808 = vadd.f32 %v1462, %v1807
  %v1809 = vpop.f32.mrb[0].mxu0
  %v1810 = vadd.f32 %v1466, %v1809
  %1811 = vmatprep.mubr.bf16.mxu0 %v1392
  %1812 = vmatmul.mubr.bf16.gmra.mrb[0].mxu0 %v1391
  %v1813 = vpop.f32.mrb[0].mxu0
  %v1814 = vadd.f32 %v1462, %v1813
  %v1815 = vpop.f32.mrb[0].mxu0
  %v1816 = vadd.f32 %v1466, %v1815
  %v1817 = vpop.f32.mrb[0].mxu0
  %v1818 = vadd.f32 %v1462, %v1817
  %v1819 = vpop.f32.mrb[0].mxu0
  %v1820 = vadd.f32 %v1466, %v1819
  %1821 = vmatprep.mubr.bf16.mxu0 %v1394
  %1822 = vmatmul.mubr.bf16.gmra.mrb[0].mxu0 %v1393
  %v1823 = vpop.f32.mrb[0].mxu0
  %v1824 = vadd.f32 %v1462, %v1823
  %v1825 = vpop.f32.mrb[0].mxu0
  %v1826 = vadd.f32 %v1466, %v1825
  %v1827 = vpop.f32.mrb[0].mxu0
  %v1828 = vadd.f32 %v1462, %v1827
  %v1829 = vpop.f32.mrb[0].mxu0
  %v1830 = vadd.f32 %v1466, %v1829
  %1831 = vmatprep.mubr.bf16.mxu0 %v1396
  %1832 = vmatmul.mubr.bf16.gmra.mrb[0].mxu0 %v1395
  %v1833 = vpop.f32.mrb[0].mxu0
  %v1834 = vadd.f32 %v1462, %v1833
  %v1835 = vpop.f32.mrb[0].mxu0
  %v1836 = vadd.f32 %v1466, %v1835
  %v1837 = vpop.f32.mrb[0].mxu0
  %v1838 = vadd.f32 %v1462, %v1837
  %v1839 = vpop.f32.mrb[0].mxu0
  %v1840 = vadd.f32 %v1466, %v1839
  %1841 = vmatprep.mubr.bf16.mxu0 %v1398
  %1842 = vmatmul.mubr.bf16.gmra.mrb[0].mxu0 %v1397
  %v1843 = vpop.f32.mrb[0].mxu0
  %v1844 = vadd.f32 %v1462, %v1843
  %v1845 = vpop.f32.mrb[0].mxu0
  %v1846 = vadd.f32 %v1466, %v1845
  %v1847 = vpop.f32.mrb[0].mxu0
  %v1848 = vadd.f32 %v1462, %v1847
  %v1849 = vpop.f32.mrb[0].mxu0
  %v1850 = vadd.f32 %v1466, %v1849
  %1851 = vmatprep.mubr.bf16.mxu0 %v1400
  %1852 = vmatmul.mubr.bf16.gmra.mrb[0].mxu0 %v1399
  %v1853 = vpop.f32.mrb[0].mxu0
  %v1854 = vadd.f32 %v1462, %v1853
  %v1855 = vpop.f32.mrb[0].mxu0
  %v1856 = vadd.f32 %v1466, %v1855
  %v1857 = vpop.f32.mrb[0].mxu0
  %v1858 = vadd.f32 %v1462, %v1857
  %v1859 = vpop.f32.mrb[0].mxu0
  %v1860 = vadd.f32 %v1466, %v1859
  %1861 = vmatprep.mubr.bf16.mxu0 %v1402
  %1862 = vmatmul.mubr.bf16.gmra.mrb[0].mxu0 %v1401
  %v1863 = vpop.f32.mrb[0].mxu0
  %v1864 = vadd.f32 %v1462, %v1863
  %v1865 = vpop.f32.mrb[0].mxu0
  %v1866 = vadd.f32 %v1466, %v1865
  %v1867 = vpop.f32.mrb[0].mxu0
  %v1868 = vadd.f32 %v1462, %v1867
  %v1869 = vpop.f32.mrb[0].mxu0
  %v1870 = vadd.f32 %v1466, %v1869
  %1871 = vmatprep.mubr.bf16.mxu0 %v1404
  %1872 = vmatmul.mubr.bf16.gmra.mrb[0].mxu0 %v1403
  %v1873 = vpop.f32.mrb[0].mxu0
  %v1874 = vadd.f32 %v1462, %v1873
  %v1875 = vpop.f32.mrb[0].mxu0
  %v1876 = vadd.f32 %v1466, %v1875
  %v1877 = vpop.f32.mrb[0].mxu0
  %v1878 = vadd.f32 %v1462, %v1877
  %v1879 = vpop.f32.mrb[0].mxu0
  %v1880 = vadd.f32 %v1466, %v1879
  %1881 = vmatprep.mubr.bf16.mxu0 %v1406
  %1882 = vmatmul.mubr.bf16.gmra.mrb[0].mxu0 %v1405
  %v1883 = vpop.f32.mrb[0].mxu0
  %v1884 = vadd.f32 %v1462, %v1883
  %v1885 = vpop.f32.mrb[0].mxu0
  %v1886 = vadd.f32 %v1466, %v1885
  %v1887 = vpop.f32.mrb[0].mxu0
  %v1888 = vadd.f32 %v1462, %v1887
  %v1889 = vpop.f32.mrb[0].mxu0
  %v1890 = vadd.f32 %v1466, %v1889
  %1891 = vmatprep.mubr.bf16.mxu0 %v1408
  %1892 = vmatmul.mubr.bf16.gmra.mrb[0].mxu0 %v1407
  %v1893 = vpop.f32.mrb[0].mxu0
  %v1894 = vadd.f32 %v1462, %v1893
  %v1895 = vpop.f32.mrb[0].mxu0
  %v1896 = vadd.f32 %v1466, %v1895
  %v1897 = vpop.f32.mrb[0].mxu0
  %v1898 = vadd.f32 %v1462, %v1897
  %v1899 = vpop.f32.mrb[0].mxu0
  %v1900 = vadd.f32 %v1466, %v1899
  %1901 = vmatprep.mubr.bf16.mxu0 %v1410
  %1902 = vmatmul.mubr.bf16.gmra.mrb[0].mxu0 %v1409
  %v1903 = vpop.f32.mrb[0].mxu0
  %v1904 = vadd.f32 %v1462, %v1903
  %v1905 = vpop.f32.mrb[0].mxu0
  %v1906 = vadd.f32 %v1466, %v1905
  %v1907 = vpop.f32.mrb[0].mxu0
  %v1908 = vadd.f32 %v1462, %v1907
  %v1909 = vpop.f32.mrb[0].mxu0
  %v1910 = vadd.f32 %v1466, %v1909
  %1911 = vmatprep.mubr.bf16.mxu0 %v1412
  %1912 = vmatmul.mubr.bf16.gmra.mrb[0].mxu0 %v1411
  %v1913 = vpop.f32.mrb[0].mxu0
  %v1914 = vadd.f32 %v1462, %v1913
  %v1915 = vpop.f32.mrb[0].mxu0
  %v1916 = vadd.f32 %v1466, %v1915
  %v1917 = vpop.f32.mrb[0].mxu0
  %v1918 = vadd.f32 %v1462, %v1917
  %v1919 = vpop.f32.mrb[0].mxu0
  %v1920 = vadd.f32 %v1466, %v1919
  %1921 = vmatprep.mubr.bf16.mxu0 %v1414
  %1922 = vmatmul.mubr.bf16.gmra.mrb[0].mxu0 %v1413
  %v1923 = vpop.f32.mrb[0].mxu0
  %v1924 = vadd.f32 %v1462, %v1923
  %v1925 = vpop.f32.mrb[0].mxu0
  %v1926 = vadd.f32 %v1466, %v1925
  %v1927 = vpop.f32.mrb[0].mxu0
  %v1928 = vadd.f32 %v1462, %v1927
  %v1929 = vpop.f32.mrb[0].mxu0
  %v1930 = vadd.f32 %v1466, %v1929
  %1931 = vmatprep.mubr.bf16.mxu0 %v1416
  %1932 = vmatmul.mubr.bf16.gmra.mrb[0].mxu0 %v1415
  %v1933 = vpop.f32.mrb[0].mxu0
  %v1934 = vadd.f32 %v1462, %v1933
  %v1935 = vpop.f32.mrb[0].mxu0
  %v1936 = vadd.f32 %v1466, %v1935
  %v1937 = vpop.f32.mrb[0].mxu0
  %v1938 = vadd.f32 %v1462, %v1937
  %v1939 = vpop.f32.mrb[0].mxu0
  %v1940 = vadd.f32 %v1466, %v1939
  %1941 = vmatprep.mubr.bf16.mxu0 %v1418
  %1942 = vmatmul.mubr.bf16.gmra.mrb[0].mxu0 %v1417
  %v1943 = vpop.f32.mrb[0].mxu0
  %v1944 = vadd.f32 %v1462, %v1943
  %v1945 = vpop.f32.mrb[0].mxu0
  %v1946 = vadd.f32 %v1466, %v1945
  %v1947 = vpop.f32.mrb[0].mxu0
  %v1948 = vadd.f32 %v1462, %v1947
  %v1949 = vpop.f32.mrb[0].mxu0
  %v1950 = vadd.f32 %v1466, %v1949
  %1951 = vmatprep.mubr.bf16.mxu0 %v1420
  %1952 = vmatmul.mubr.bf16.gmra.mrb[0].mxu0 %v1419
  %v1953 = vpop.f32.mrb[0].mxu0
  %v1954 = vadd.f32 %v1462, %v1953
  %v1955 = vpop.f32.mrb[0].mxu0
  %v1956 = vadd.f32 %v1466, %v1955
  %v1957 = vpop.f32.mrb[0].mxu0
  %v1958 = vadd.f32 %v1462, %v1957
  %v1959 = vpop.f32.mrb[0].mxu0
  %v1960 = vadd.f32 %v1466, %v1959
  %1961 = vmatprep.mubr.bf16.mxu0 %v1422
  %1962 = vmatmul.mubr.bf16.gmra.mrb[0].mxu0 %v1421
  %v1963 = vpop.f32.mrb[0].mxu0
  %v1964 = vadd.f32 %v1462, %v1963
  %v1965 = vpop.f32.mrb[0].mxu0
  %v1966 = vadd.f32 %v1466, %v1965
  %v1967 = vpop.f32.mrb[0].mxu0
  %v1968 = vadd.f32 %v1462, %v1967
  %v1969 = vpop.f32.mrb[0].mxu0
  %v1970 = vadd.f32 %v1466, %v1969
  %1971 = vmatprep.mubr.bf16.mxu0 %v1424
  %1972 = vmatmul.mubr.bf16.gmra.mrb[0].mxu0 %v1423
  %v1973 = vpop.f32.mrb[0].mxu0
  %v1974 = vadd.f32 %v1462, %v1973
  %v1975 = vpop.f32.mrb[0].mxu0
  %v1976 = vadd.f32 %v1466, %v1975
  %v1977 = vpop.f32.mrb[0].mxu0
  %v1978 = vadd.f32 %v1462, %v1977
  %v1979 = vpop.f32.mrb[0].mxu0
  %v1980 = vadd.f32 %v1466, %v1979
  %1981 = vdwg.mxu0
  %v1982 = vmax.f32 %v1664, 0.0
  %v1983 = vmax.f32 %v1666, 0.0
  %v1984 = vmax.f32 %v1668, 0.0
  %v1985 = vmax.f32 %v1670, 0.0
  %v1986 = vmax.f32 %v1674, 0.0
  %v1987 = vmax.f32 %v1676, 0.0
  %v1988 = vmax.f32 %v1678, 0.0
  %v1989 = vmax.f32 %v1680, 0.0
  %v1990 = vmax.f32 %v1684, 0.0
  %v1991 = vmax.f32 %v1686, 0.0
  %v1992 = vmax.f32 %v1688, 0.0
  %v1993 = vmax.f32 %v1690, 0.0
  %v1994 = vmax.f32 %v1694, 0.0
  %v1995 = vmax.f32 %v1696, 0.0
  %v1996 = vmax.f32 %v1698, 0.0
  %v1997 = vmax.f32 %v1700, 0.0
  %v1998 = vmax.f32 %v1704, 0.0
  %v1999 = vmax.f32 %v1706, 0.0
  %v2000 = vmax.f32 %v1708, 0.0
  %v2001 = vmax.f32 %v1710, 0.0
  %v2002 = vmax.f32 %v1714, 0.0
  %v2003 = vmax.f32 %v1716, 0.0
  %v2004 = vmax.f32 %v1718, 0.0
  %v2005 = vmax.f32 %v1720, 0.0
  %v2006 = vmax.f32 %v1724, 0.0
  %v2007 = vmax.f32 %v1726, 0.0
  %v2008 = vmax.f32 %v1728, 0.0
  %v2009 = vmax.f32 %v1730, 0.0
  %v2010 = vmax.f32 %v1734, 0.0
  %v2011 = vmax.f32 %v1736, 0.0
  %v2012 = vmax.f32 %v1738, 0.0
  %v2013 = vmax.f32 %v1740, 0.0
  %v2014 = vmax.f32 %v1744, 0.0
  %v2015 = vmax.f32 %v1746, 0.0
  %v2016 = vmax.f32 %v1748, 0.0
  %v2017 = vmax.f32 %v1750, 0.0
  %v2018 = vmax.f32 %v1754, 0.0
  %v2019 = vmax.f32 %v1756, 0.0
  %v2020 = vmax.f32 %v1758, 0.0
  %v2021 = vmax.f32 %v1760, 0.0
  %v2022 = vmax.f32 %v1764, 0.0
  %v2023 = vmax.f32 %v1766, 0.0
  %v2024 = vmax.f32 %v1768, 0.0
  %v2025 = vmax.f32 %v1770, 0.0
  %v2026 = vmax.f32 %v1774, 0.0
  %v2027 = vmax.f32 %v1776, 0.0
  %v2028 = vmax.f32 %v1778, 0.0
  %v2029 = vmax.f32 %v1780, 0.0
  %v2030 = vmax.f32 %v1784, 0.0
  %v2031 = vmax.f32 %v1786, 0.0
  %v2032 = vmax.f32 %v1788, 0.0
  %v2033 = vmax.f32 %v1790, 0.0
  %v2034 = vmax.f32 %v1794, 0.0
  %v2035 = vmax.f32 %v1796, 0.0
  %v2036 = vmax.f32 %v1798, 0.0
  %v2037 = vmax.f32 %v1800, 0.0
  %v2038 = vmax.f32 %v1804, 0.0
  %v2039 = vmax.f32 %v1806, 0.0
  %v2040 = vmax.f32 %v1808, 0.0
  %v2041 = vmax.f32 %v1810, 0.0
  %v2042 = vmax.f32 %v1814, 0.0
  %v2043 = vmax.f32 %v1816, 0.0
  %v2044 = vmax.f32 %v1818, 0.0
  %v2045 = vmax.f32 %v1820, 0.0
  %v2046 = vmax.f32 %v1824, 0.0
  %v2047 = vmax.f32 %v1826, 0.0
  %v2048 = vmax.f32 %v1828, 0.0
  %v2049 = vmax.f32 %v1830, 0.0
  %v2050 = vmax.f32 %v1834, 0.0
  %v2051 = vmax.f32 %v1836, 0.0
  %v2052 = vmax.f32 %v1838, 0.0
  %v2053 = vmax.f32 %v1840, 0.0
  %v2054 = vmax.f32 %v1844, 0.0
  %v2055 = vmax.f32 %v1846, 0.0
  %v2056 = vmax.f32 %v1848, 0.0
  %v2057 = vmax.f32 %v1850, 0.0
  %v2058 = vmax.f32 %v1854, 0.0
  %v2059 = vmax.f32 %v1856, 0.0
  %v2060 = vmax.f32 %v1858, 0.0
  %v2061 = vmax.f32 %v1860, 0.0
  %v2062 = vmax.f32 %v1864, 0.0
  %v2063 = vmax.f32 %v1866, 0.0
  %v2064 = vmax.f32 %v1868, 0.0
  %v2065 = vmax.f32 %v1870, 0.0
  %v2066 = vmax.f32 %v1874, 0.0
  %v2067 = vmax.f32 %v1876, 0.0
  %v2068 = vmax.f32 %v1878, 0.0
  %v2069 = vmax.f32 %v1880, 0.0
  %v2070 = vmax.f32 %v1884, 0.0
  %v2071 = vmax.f32 %v1886, 0.0
  %v2072 = vmax.f32 %v1888, 0.0
  %v2073 = vmax.f32 %v1890, 0.0
  %v2074 = vmax.f32 %v1894, 0.0
  %v2075 = vmax.f32 %v1896, 0.0
  %v2076 = vmax.f32 %v1898, 0.0
  %v2077 = vmax.f32 %v1900, 0.0
  %v2078 = vmax.f32 %v1904, 0.0
  %v2079 = vmax.f32 %v1906, 0.0
  %v2080 = vmax.f32 %v1908, 0.0
  %v2081 = vmax.f32 %v1910, 0.0
  %v2082 = vmax.f32 %v1914, 0.0
  %v2083 = vmax.f32 %v1916, 0.0
  %v2084 = vmax.f32 %v1918, 0.0
  %v2085 = vmax.f32 %v1920, 0.0
  %v2086 = vmax.f32 %v1924, 0.0
  %v2087 = vmax.f32 %v1926, 0.0
  %v2088 = vmax.f32 %v1928, 0.0
  %v2089 = vmax.f32 %v1930, 0.0
  %v2090 = vmax.f32 %v1934, 0.0
  %v2091 = vmax.f32 %v1936, 0.0
  %v2092 = vmax.f32 %v1938, 0.0
  %v2093 = vmax.f32 %v1940, 0.0
  %v2094 = vmax.f32 %v1944, 0.0
  %v2095 = vmax.f32 %v1946, 0.0
  %v2096 = vmax.f32 %v1948, 0.0
  %v2097 = vmax.f32 %v1950, 0.0
  %v2098 = vmax.f32 %v1954, 0.0
  %v2099 = vmax.f32 %v1956, 0.0
  %v2100 = vmax.f32 %v1958, 0.0
  %v2101 = vmax.f32 %v1960, 0.0
  %v2102 = vmax.f32 %v1964, 0.0
  %v2103 = vmax.f32 %v1966, 0.0
  %v2104 = vmax.f32 %v1968, 0.0
  %v2105 = vmax.f32 %v1970, 0.0
  %v2106 = vmax.f32 %v1974, 0.0
  %v2107 = vmax.f32 %v1976, 0.0
  %v2108 = vmax.f32 %v1978, 0.0
  %v2109 = vmax.f32 %v1980, 0.0
  %v2110 = vpack.c.bf16 %v1984, %v1982
  %v2111 = vpack.c.bf16 %v1985, %v1983
  %v2112 = vpack.c.bf16 %v1988, %v1986
  %v2113 = vpack.c.bf16 %v1989, %v1987
  %v2114 = vpack.c.bf16 %v1992, %v1990
  %v2115 = vpack.c.bf16 %v1993, %v1991
  %v2116 = vpack.c.bf16 %v1996, %v1994
  %v2117 = vpack.c.bf16 %v1997, %v1995
  %v2118 = vpack.c.bf16 %v2000, %v1998
  %v2119 = vpack.c.bf16 %v2001, %v1999
  %v2120 = vpack.c.bf16 %v2004, %v2002
  %v2121 = vpack.c.bf16 %v2005, %v2003
  %v2122 = vpack.c.bf16 %v2008, %v2006
  %v2123 = vpack.c.bf16 %v2009, %v2007
  %v2124 = vpack.c.bf16 %v2012, %v2010
  %v2125 = vpack.c.bf16 %v2013, %v2011
  %v2126 = vpack.c.bf16 %v2016, %v2014
  %v2127 = vpack.c.bf16 %v2017, %v2015
  %v2128 = vpack.c.bf16 %v2020, %v2018
  %v2129 = vpack.c.bf16 %v2021, %v2019
  %v2130 = vpack.c.bf16 %v2024, %v2022
  %v2131 = vpack.c.bf16 %v2025, %v2023
  %v2132 = vpack.c.bf16 %v2028, %v2026
  %v2133 = vpack.c.bf16 %v2029, %v2027
  %v2134 = vpack.c.bf16 %v2032, %v2030
  %v2135 = vpack.c.bf16 %v2033, %v2031
  %v2136 = vpack.c.bf16 %v2036, %v2034
  %v2137 = vpack.c.bf16 %v2037, %v2035
  %v2138 = vpack.c.bf16 %v2040, %v2038
  %v2139 = vpack.c.bf16 %v2041, %v2039
  %v2140 = vpack.c.bf16 %v2044, %v2042
  %v2141 = vpack.c.bf16 %v2045, %v2043
  %v2142 = vpack.c.bf16 %v2048, %v2046
  %v2143 = vpack.c.bf16 %v2049, %v2047
  %v2144 = vpack.c.bf16 %v2052, %v2050
  %v2145 = vpack.c.bf16 %v2053, %v2051
  %v2146 = vpack.c.bf16 %v2056, %v2054
  %v2147 = vpack.c.bf16 %v2057, %v2055
  %v2148 = vpack.c.bf16 %v2060, %v2058
  %v2149 = vpack.c.bf16 %v2061, %v2059
  %v2150 = vpack.c.bf16 %v2064, %v2062
  %v2151 = vpack.c.bf16 %v2065, %v2063
  %v2152 = vpack.c.bf16 %v2068, %v2066
  %v2153 = vpack.c.bf16 %v2069, %v2067
  %v2154 = vpack.c.bf16 %v2072, %v2070
  %v2155 = vpack.c.bf16 %v2073, %v2071
  %v2156 = vpack.c.bf16 %v2076, %v2074
  %v2157 = vpack.c.bf16 %v2077, %v2075
  %v2158 = vpack.c.bf16 %v2080, %v2078
  %v2159 = vpack.c.bf16 %v2081, %v2079
  %v2160 = vpack.c.bf16 %v2084, %v2082
  %v2161 = vpack.c.bf16 %v2085, %v2083
  %v2162 = vpack.c.bf16 %v2088, %v2086
  %v2163 = vpack.c.bf16 %v2089, %v2087
  %v2164 = vpack.c.bf16 %v2092, %v2090
  %v2165 = vpack.c.bf16 %v2093, %v2091
  %v2166 = vpack.c.bf16 %v2096, %v2094
  %v2167 = vpack.c.bf16 %v2097, %v2095
  %v2168 = vpack.c.bf16 %v2100, %v2098
  %v2169 = vpack.c.bf16 %v2101, %v2099
  %v2170 = vpack.c.bf16 %v2104, %v2102
  %v2171 = vpack.c.bf16 %v2105, %v2103
  %v2172 = vpack.c.bf16 %v2108, %v2106
  %v2173 = vpack.c.bf16 %v2109, %v2107
  %v2238 = vunpack.c.l.b16 %v2110
  %v2239 = vunpack.c.l.b16 %v2111
  %v2240 = vunpack.c.h.b16 %v2110
  %v2241 = vunpack.c.h.b16 %v2111
  %v2242 = vunpack.c.l.b16 %v2112
  %v2243 = vunpack.c.l.b16 %v2113
  %v2244 = vunpack.c.h.b16 %v2112
  %v2245 = vunpack.c.h.b16 %v2113
  %v2246 = vunpack.c.l.b16 %v2114
  %v2247 = vunpack.c.l.b16 %v2115
  %v2248 = vunpack.c.h.b16 %v2114
  %v2249 = vunpack.c.h.b16 %v2115
  %v2250 = vunpack.c.l.b16 %v2116
  %v2251 = vunpack.c.l.b16 %v2117
  %v2252 = vunpack.c.h.b16 %v2116
  %v2253 = vunpack.c.h.b16 %v2117
  %v2254 = vunpack.c.l.b16 %v2118
  %v2255 = vunpack.c.l.b16 %v2119
  %v2256 = vunpack.c.h.b16 %v2118
  %v2257 = vunpack.c.h.b16 %v2119
  %v2258 = vunpack.c.l.b16 %v2120
  %v2259 = vunpack.c.l.b16 %v2121
  %v2260 = vunpack.c.h.b16 %v2120
  %v2261 = vunpack.c.h.b16 %v2121
  %v2262 = vunpack.c.l.b16 %v2122
  %v2263 = vunpack.c.l.b16 %v2123
  %v2264 = vunpack.c.h.b16 %v2122
  %v2265 = vunpack.c.h.b16 %v2123
  %v2266 = vunpack.c.l.b16 %v2124
  %v2267 = vunpack.c.l.b16 %v2125
  %v2268 = vunpack.c.h.b16 %v2124
  %v2269 = vunpack.c.h.b16 %v2125
  %v2270 = vunpack.c.l.b16 %v2126
  %v2271 = vunpack.c.l.b16 %v2127
  %v2272 = vunpack.c.h.b16 %v2126
  %v2273 = vunpack.c.h.b16 %v2127
  %v2274 = vunpack.c.l.b16 %v2128
  %v2275 = vunpack.c.l.b16 %v2129
  %v2276 = vunpack.c.h.b16 %v2128
  %v2277 = vunpack.c.h.b16 %v2129
  %v2278 = vunpack.c.l.b16 %v2130
  %v2279 = vunpack.c.l.b16 %v2131
  %v2280 = vunpack.c.h.b16 %v2130
  %v2281 = vunpack.c.h.b16 %v2131
  %v2282 = vunpack.c.l.b16 %v2132
  %v2283 = vunpack.c.l.b16 %v2133
  %v2284 = vunpack.c.h.b16 %v2132
  %v2285 = vunpack.c.h.b16 %v2133
  %v2286 = vunpack.c.l.b16 %v2134
  %v2287 = vunpack.c.l.b16 %v2135
  %v2288 = vunpack.c.h.b16 %v2134
  %v2289 = vunpack.c.h.b16 %v2135
  %v2290 = vunpack.c.l.b16 %v2136
  %v2291 = vunpack.c.l.b16 %v2137
  %v2292 = vunpack.c.h.b16 %v2136
  %v2293 = vunpack.c.h.b16 %v2137
  %v2294 = vunpack.c.l.b16 %v2138
  %v2295 = vunpack.c.l.b16 %v2139
  %v2296 = vunpack.c.h.b16 %v2138
  %v2297 = vunpack.c.h.b16 %v2139
  %v2298 = vunpack.c.l.b16 %v2140
  %v2299 = vunpack.c.l.b16 %v2141
  %v2300 = vunpack.c.h.b16 %v2140
  %v2301 = vunpack.c.h.b16 %v2141
  %v2302 = vunpack.c.l.b16 %v2142
  %v2303 = vunpack.c.l.b16 %v2143
  %v2304 = vunpack.c.h.b16 %v2142
  %v2305 = vunpack.c.h.b16 %v2143
  %v2306 = vunpack.c.l.b16 %v2144
  %v2307 = vunpack.c.l.b16 %v2145
  %v2308 = vunpack.c.h.b16 %v2144
  %v2309 = vunpack.c.h.b16 %v2145
  %v2310 = vunpack.c.l.b16 %v2146
  %v2311 = vunpack.c.l.b16 %v2147
  %v2312 = vunpack.c.h.b16 %v2146
  %v2313 = vunpack.c.h.b16 %v2147
  %v2314 = vunpack.c.l.b16 %v2148
  %v2315 = vunpack.c.l.b16 %v2149
  %v2316 = vunpack.c.h.b16 %v2148
  %v2317 = vunpack.c.h.b16 %v2149
  %v2318 = vunpack.c.l.b16 %v2150
  %v2319 = vunpack.c.l.b16 %v2151
  %v2320 = vunpack.c.h.b16 %v2150
  %v2321 = vunpack.c.h.b16 %v2151
  %v2322 = vunpack.c.l.b16 %v2152
  %v2323 = vunpack.c.l.b16 %v2153
  %v2324 = vunpack.c.h.b16 %v2152
  %v2325 = vunpack.c.h.b16 %v2153
  %v2326 = vunpack.c.l.b16 %v2154
  %v2327 = vunpack.c.l.b16 %v2155
  %v2328 = vunpack.c.h.b16 %v2154
  %v2329 = vunpack.c.h.b16 %v2155
  %v2330 = vunpack.c.l.b16 %v2156
  %v2331 = vunpack.c.l.b16 %v2157
  %v2332 = vunpack.c.h.b16 %v2156
  %v2333 = vunpack.c.h.b16 %v2157
  %v2334 = vunpack.c.l.b16 %v2158
  %v2335 = vunpack.c.l.b16 %v2159
  %v2336 = vunpack.c.h.b16 %v2158
  %v2337 = vunpack.c.h.b16 %v2159
  %v2338 = vunpack.c.l.b16 %v2160
  %v2339 = vunpack.c.l.b16 %v2161
  %v2340 = vunpack.c.h.b16 %v2160
  %v2341 = vunpack.c.h.b16 %v2161
  %v2342 = vunpack.c.l.b16 %v2162
  %v2343 = vunpack.c.l.b16 %v2163
  %v2344 = vunpack.c.h.b16 %v2162
  %v2345 = vunpack.c.h.b16 %v2163
  %v2346 = vunpack.c.l.b16 %v2164
  %v2347 = vunpack.c.l.b16 %v2165
  %v2348 = vunpack.c.h.b16 %v2164
  %v2349 = vunpack.c.h.b16 %v2165
  %v2350 = vunpack.c.l.b16 %v2166
  %v2351 = vunpack.c.l.b16 %v2167
  %v2352 = vunpack.c.h.b16 %v2166
  %v2353 = vunpack.c.h.b16 %v2167
  %v2354 = vunpack.c.l.b16 %v2168
  %v2355 = vunpack.c.l.b16 %v2169
  %v2356 = vunpack.c.h.b16 %v2168
  %v2357 = vunpack.c.h.b16 %v2169
  %v2358 = vunpack.c.l.b16 %v2170
  %v2359 = vunpack.c.l.b16 %v2171
  %v2360 = vunpack.c.h.b16 %v2170
  %v2361 = vunpack.c.h.b16 %v2171
  %v2362 = vunpack.c.l.b16 %v2172
  %v2363 = vunpack.c.l.b16 %v2173
  %v2364 = vunpack.c.h.b16 %v2172
  %v2365 = vunpack.c.h.b16 %v2173
  %v2366 = vpack.c.b16 %v2239, %v2238
  %v2367 = vpack.c.b16 %v2241, %v2240
  %v2368 = vpack.c.b16 %v2243, %v2242
  %v2369 = vpack.c.b16 %v2245, %v2244
  %v2370 = vpack.c.b16 %v2247, %v2246
  %v2371 = vpack.c.b16 %v2249, %v2248
  %v2372 = vpack.c.b16 %v2251, %v2250
  %v2373 = vpack.c.b16 %v2253, %v2252
  %v2374 = vpack.c.b16 %v2255, %v2254
  %v2375 = vpack.c.b16 %v2257, %v2256
  %v2376 = vpack.c.b16 %v2259, %v2258
  %v2377 = vpack.c.b16 %v2261, %v2260
  %v2378 = vpack.c.b16 %v2263, %v2262
  %v2379 = vpack.c.b16 %v2265, %v2264
  %v2380 = vpack.c.b16 %v2267, %v2266
  %v2381 = vpack.c.b16 %v2269, %v2268
  %v2382 = vpack.c.b16 %v2271, %v2270
  %v2383 = vpack.c.b16 %v2273, %v2272
  %v2384 = vpack.c.b16 %v2275, %v2274
  %v2385 = vpack.c.b16 %v2277, %v2276
  %v2386 = vpack.c.b16 %v2279, %v2278
  %v2387 = vpack.c.b16 %v2281, %v2280
  %v2388 = vpack.c.b16 %v2283, %v2282
  %v2389 = vpack.c.b16 %v2285, %v2284
  %v2390 = vpack.c.b16 %v2287, %v2286
  %v2391 = vpack.c.b16 %v2289, %v2288
  %v2392 = vpack.c.b16 %v2291, %v2290
  %v2393 = vpack.c.b16 %v2293, %v2292
  %v2394 = vpack.c.b16 %v2295, %v2294
  %v2395 = vpack.c.b16 %v2297, %v2296
  %v2396 = vpack.c.b16 %v2299, %v2298
  %v2397 = vpack.c.b16 %v2301, %v2300
  %v2398 = vpack.c.b16 %v2303, %v2302
  %v2399 = vpack.c.b16 %v2305, %v2304
  %v2400 = vpack.c.b16 %v2307, %v2306
  %v2401 = vpack.c.b16 %v2309, %v2308
  %v2402 = vpack.c.b16 %v2311, %v2310
  %v2403 = vpack.c.b16 %v2313, %v2312
  %v2404 = vpack.c.b16 %v2315, %v2314
  %v2405 = vpack.c.b16 %v2317, %v2316
  %v2406 = vpack.c.b16 %v2319, %v2318
  %v2407 = vpack.c.b16 %v2321, %v2320
  %v2408 = vpack.c.b16 %v2323, %v2322
  %v2409 = vpack.c.b16 %v2325, %v2324
  %v2410 = vpack.c.b16 %v2327, %v2326
  %v2411 = vpack.c.b16 %v2329, %v2328
  %v2412 = vpack.c.b16 %v2331, %v2330
  %v2413 = vpack.c.b16 %v2333, %v2332
  %v2414 = vpack.c.b16 %v2335, %v2334
  %v2415 = vpack.c.b16 %v2337, %v2336
  %v2416 = vpack.c.b16 %v2339, %v2338
  %v2417 = vpack.c.b16 %v2341, %v2340
  %v2418 = vpack.c.b16 %v2343, %v2342
  %v2419 = vpack.c.b16 %v2345, %v2344
  %v2420 = vpack.c.b16 %v2347, %v2346
  %v2421 = vpack.c.b16 %v2349, %v2348
  %v2422 = vpack.c.b16 %v2351, %v2350
  %v2423 = vpack.c.b16 %v2353, %v2352
  %v2424 = vpack.c.b16 %v2355, %v2354
  %v2425 = vpack.c.b16 %v2357, %v2356
  %v2426 = vpack.c.b16 %v2359, %v2358
  %v2427 = vpack.c.b16 %v2361, %v2360
  %v2428 = vpack.c.b16 %v2363, %v2362
  %v2429 = vpack.c.b16 %v2365, %v2364
  %2494 = vst [vmem:[%s7] sm:$0xff] %v2366
  %2495 = vst [vmem:[%s7 + $0x8] sm:$0xff] %v2367
  %2496 = vst [vmem:[%s7 + $0x10] sm:$0xff] %v2368
  %2497 = vst [vmem:[%s7 + $0x18] sm:$0xff] %v2369
  %2498 = vst [vmem:[%s7 + $0x20] sm:$0xff] %v2370
  %2499 = vst [vmem:[%s7 + $0x28] sm:$0xff] %v2371
  %2500 = vst [vmem:[%s7 + $0x30] sm:$0xff] %v2372
  %2501 = vst [vmem:[%s7 + $0x38] sm:$0xff] %v2373
  %2502 = vst [vmem:[%s7 + $0x40] sm:$0xff] %v2374
  %2503 = vst [vmem:[%s7 + $0x48] sm:$0xff] %v2375
  %2504 = vst [vmem:[%s7 + $0x50] sm:$0xff] %v2376
  %2505 = vst [vmem:[%s7 + $0x58] sm:$0xff] %v2377
  %2506 = vst [vmem:[%s7 + $0x60] sm:$0xff] %v2378
  %2507 = vst [vmem:[%s7 + $0x68] sm:$0xff] %v2379
  %2508 = vst [vmem:[%s7 + $0x70] sm:$0xff] %v2380
  %2509 = vst [vmem:[%s7 + $0x78] sm:$0xff] %v2381
  %2510 = vst [vmem:[%s7 + $0x80] sm:$0xff] %v2382
  %2511 = vst [vmem:[%s7 + $0x88] sm:$0xff] %v2383
  %2512 = vst [vmem:[%s7 + $0x90] sm:$0xff] %v2384
  %2513 = vst [vmem:[%s7 + $0x98] sm:$0xff] %v2385
  %2514 = vst [vmem:[%s7 + $0xa0] sm:$0xff] %v2386
  %2515 = vst [vmem:[%s7 + $0xa8] sm:$0xff] %v2387
  %2516 = vst [vmem:[%s7 + $0xb0] sm:$0xff] %v2388
  %2517 = vst [vmem:[%s7 + $0xb8] sm:$0xff] %v2389
  %2518 = vst [vmem:[%s7 + $0xc0] sm:$0xff] %v2390
  %2519 = vst [vmem:[%s7 + $0xc8] sm:$0xff] %v2391
  %2520 = vst [vmem:[%s7 + $0xd0] sm:$0xff] %v2392
  %2521 = vst [vmem:[%s7 + $0xd8] sm:$0xff] %v2393
  %2522 = vst [vmem:[%s7 + $0xe0] sm:$0xff] %v2394
  %2523 = vst [vmem:[%s7 + $0xe8] sm:$0xff] %v2395
  %2524 = vst [vmem:[%s7 + $0xf0] sm:$0xff] %v2396
  %2525 = vst [vmem:[%s7 + $0xf8] sm:$0xff] %v2397
  %2526 = vst [vmem:[%s7 + $0x100] sm:$0xff] %v2398
  %2527 = vst [vmem:[%s7 + $0x108] sm:$0xff] %v2399
  %2528 = vst [vmem:[%s7 + $0x110] sm:$0xff] %v2400
  %2529 = vst [vmem:[%s7 + $0x118] sm:$0xff] %v2401
  %2530 = vst [vmem:[%s7 + $0x120] sm:$0xff] %v2402
  %2531 = vst [vmem:[%s7 + $0x128] sm:$0xff] %v2403
  %2532 = vst [vmem:[%s7 + $0x130] sm:$0xff] %v2404
  %2533 = vst [vmem:[%s7 + $0x138] sm:$0xff] %v2405
  %2534 = vst [vmem:[%s7 + $0x140] sm:$0xff] %v2406
  %2535 = vst [vmem:[%s7 + $0x148] sm:$0xff] %v2407
  %2536 = vst [vmem:[%s7 + $0x150] sm:$0xff] %v2408
  %2537 = vst [vmem:[%s7 + $0x158] sm:$0xff] %v2409
  %2538 = vst [vmem:[%s7 + $0x160] sm:$0xff] %v2410
  %2539 = vst [vmem:[%s7 + $0x168] sm:$0xff] %v2411
  %2540 = vst [vmem:[%s7 + $0x170] sm:$0xff] %v2412
  %2541 = vst [vmem:[%s7 + $0x178] sm:$0xff] %v2413
  %2542 = vst [vmem:[%s7 + $0x180] sm:$0xff] %v2414
  %2543 = vst [vmem:[%s7 + $0x188] sm:$0xff] %v2415
  %2544 = vst [vmem:[%s7 + $0x190] sm:$0xff] %v2416
  %2545 = vst [vmem:[%s7 + $0x198] sm:$0xff] %v2417
  %2546 = vst [vmem:[%s7 + $0x1a0] sm:$0xff] %v2418
  %2547 = vst [vmem:[%s7 + $0x1a8] sm:$0xff] %v2419
  %2548 = vst [vmem:[%s7 + $0x1b0] sm:$0xff] %v2420
  %2549 = vst [vmem:[%s7 + $0x1b8] sm:$0xff] %v2421
  %2550 = vst [vmem:[%s7 + $0x1c0] sm:$0xff] %v2422
  %2551 = vst [vmem:[%s7 + $0x1c8] sm:$0xff] %v2423
  %2552 = vst [vmem:[%s7 + $0x1d0] sm:$0xff] %v2424
  %2553 = vst [vmem:[%s7 + $0x1d8] sm:$0xff] %v2425
  %2554 = vst [vmem:[%s7 + $0x1e0] sm:$0xff] %v2426
  %2555 = vst [vmem:[%s7 + $0x1e8] sm:$0xff] %v2427
  %2556 = vst [vmem:[%s7 + $0x1f0] sm:$0xff] %v2428
  %2557 = vst [vmem:[%s7 + $0x1f8] sm:$0xff] %v2429
  // Predicated region
  $region30: #{conv_decoder.1} parent=0 // pred_check
    _
  $region31: #{conv_decoder.1} parent=0 // pred_check_branch
    %2559 = sbr.rel (0) target = $region33
  $region32: #{conv_decoder.1} parent=0 // pred_region
    _
  $region33: #{conv_decoder.1} parent=0 // pred_fallthru
    _
  // Predicated region
  $region34: #{conv_decoder.1} parent=0 // pred_check
    _
  $region35: #{conv_decoder.1} parent=0 // pred_check_branch
    %2561 = sbr.rel (0) target = $region37
  $region36: #{conv_decoder.1} parent=0 // pred_region
    _
  $region37: #{conv_decoder.1} parent=0 // pred_fallthru
    _

</llo_original>
